<compile_context>
chip_gen: v6e
topology: v6e:2x2x1
jax: 0.10.0
libtpu: 0.0.40
codegen_flags: <defaults>
</compile_context>

<pallas_src>
import functools

import jax
import jax.numpy as jnp
import numpy as np
from jax import lax
from jax.experimental import pallas as pl
from jax.experimental.pallas import tpu as pltpu

# ---------------- LFQ config (== LFQ(dim=32, codebook_size=256)) ------------
DIM = 32                      # module `dim` (input channels)
CODEBOOK_SIZE = 256           # power of 2
CODEBOOK_DIM = 8              # log2(codebook_size)
CODEBOOK_SCALE = 1.0
ENTROPY_LOSS_WEIGHT = 0.1
COMMITMENT_LOSS_WEIGHT = 0.25
DIVERSITY_GAMMA = 1.0
INV_TEMPERATURE = 100.0
EPS = 1e-5
TARGET_TILE_N = 2048          # tokens per grid step (sweepable 512-4096)


def _round_up(x, m):
    return ((x + m - 1) // m) * m


def _nibble_selectors():
    """0/1 selection matrices so that logpA = WAq@logq + WAn@log(1-q) (MSB
    nibble) and logpB likewise (LSB nibble); p[16a+b] = exp(logpA[a]+logpB[b])."""
    a = np.arange(16)
    nib = ((a[:, None] >> np.arange(3, -1, -1)[None, :]) & 1).astype(np.float32)  # (16,4)
    waq = np.zeros((16, CODEBOOK_DIM), np.float32)
    wan = np.zeros((16, CODEBOOK_DIM), np.float32)
    wbq = np.zeros((16, CODEBOOK_DIM), np.float32)
    wbn = np.zeros((16, CODEBOOK_DIM), np.float32)
    waq[:, 0:4] = nib
    wan[:, 0:4] = 1.0 - nib
    wbq[:, 4:8] = nib
    wbn[:, 4:8] = 1.0 - nib
    return (jnp.asarray(waq), jnp.asarray(wan), jnp.asarray(wbq), jnp.asarray(wbn))


def _lfq_kernel(x_ref, win_ref, bin_ref, wout_ref, bout_ref, mrow_ref,
                waq_ref, wan_ref, wbq_ref, wbn_ref,
                y_ref, idx_ref, ent_ref, commit_ref, prob_ref,
                ent_acc, commit_acc, prob_acc, *, hw, tile, pad_needed):
    ti = pl.program_id(1)
    n_ti = pl.num_programs(1)

    # per-batch accumulators: reset at the first token tile of this batch index
    @pl.when(ti == 0)
    def _():
        ent_acc[...] = jnp.zeros_like(ent_acc)
        commit_acc[...] = jnp.zeros_like(commit_acc)
        prob_acc[...] = jnp.zeros_like(prob_acc)

    x = x_ref[0]                                                   # (DIM, T) f32

    # project_in (channel-major): h = W_in @ x + b_in  -> (8, T)
    h = jnp.dot(win_ref[...], x, preferred_element_type=jnp.float32) + bin_ref[...]

    # sign quantization (straight-through forward value)
    posf = (h > 0.0).astype(jnp.float32)
    quant = posf * (2.0 * CODEBOOK_SCALE) - CODEBOOK_SCALE

    # integer code indices via MXU (exact: 0/1 times powers of two) -> (1, T)
    idx_f = jnp.dot(mrow_ref[...], posf, preferred_element_type=jnp.float32)
    idx_ref[0] = (idx_f + 0.5).astype(jnp.int32)

    # project_out back to DIM: y = W_out @ quant + b_out  -> (DIM, T)
    y_ref[0] = (jnp.dot(wout_ref[...], quant, preferred_element_type=jnp.float32)
                + bout_ref[...])

    # --- factorized softmax over the 2^8 codes --------------------------------
    # logits_k = 2*inv_temp * codebook[k] . h  =>  p factorizes over bits with
    # q_j = sigmoid(z_j), z_j = 4*inv_temp*h_j.
    z = (4.0 * INV_TEMPERATURE) * h                                # (8, T)
    az = jnp.abs(z)
    e = jnp.exp(-az)
    one_pe = 1.0 + e
    sp = jnp.log(one_pe)                                           # log(1+exp(-|z|))
    hb = sp + az * (e / one_pe)                                    # exact binary entropy
    lq = jnp.minimum(z, 0.0) - sp                                  # log sigmoid(z)
    l1mq = -jnp.maximum(z, 0.0) - sp                               # log sigmoid(-z)

    diff = h - quant
    dsq = diff * diff

    if pad_needed:
        col = lax.broadcasted_iota(jnp.int32, (1, tile), 1)
        valid = ((ti * tile + col) < hw).astype(jnp.float32)       # (1, T)
        hb = hb * valid
        dsq = dsq * valid

    ent_acc[...] += hb                                             # (8, T) wide
    commit_acc[...] += dsq                                         # (8, T) wide

    # nibble log-probs via tiny MXU matmuls; p[16a+b, t] = pa[a,t]*pb[b,t]
    logpa = (jnp.dot(waq_ref[...], lq, preferred_element_type=jnp.float32)
             + jnp.dot(wan_ref[...], l1mq, preferred_element_type=jnp.float32))
    logpb = (jnp.dot(wbq_ref[...], lq, preferred_element_type=jnp.float32)
             + jnp.dot(wbn_ref[...], l1mq, preferred_element_type=jnp.float32))
    pa = jnp.exp(logpa)                                            # (16, T)
    pb = jnp.exp(logpb)                                            # (16, T)
    if pad_needed:
        pa = pa * valid
    # sum over tokens of the outer product -> (16,16), done on the MXU
    prob_acc[...] += lax.dot_general(pa, pb, (((1,), (1,)), ((), ())),
                                     preferred_element_type=jnp.float32)

    # flush per-batch partials on the last token tile of this batch index
    @pl.when(ti == n_ti - 1)
    def _():
        es = jnp.sum(jnp.sum(ent_acc[...], axis=1, keepdims=True),
                     axis=0, keepdims=True)                        # (1, 1)
        cs = jnp.sum(jnp.sum(commit_acc[...], axis=1, keepdims=True),
                     axis=0, keepdims=True)                        # (1, 1)
        ent_ref[0] = es
        commit_ref[0] = cs
        prob_ref[0] = prob_acc[...]


def lfq_forward(x_nchw, params, *, target_tile=TARGET_TILE_N):
    """Runs the LFQ forward; returns (quantized NCHW, indices (b,h,w), aux_loss,
    (per_sample_entropy, codebook_entropy, commit_loss))."""
    win, bin_, wout, bout, _codebook, maskvec = params
    b, d, hh, ww = x_nchw.shape
    assert d == DIM
    hw = hh * ww
    n_total = b * hw

    # lane-dense 128-multiple token tiles; pad the spatial extent if needed
    tile = min(int(target_tile), _round_up(hw, 128))
    tile = max(128, (tile // 128) * 128)
    hw_pad = _round_up(hw, tile)
    pad_needed = hw_pad != hw
    n_ti = hw_pad // tile
    grid = (b, n_ti)

    # NCHW -> (b, DIM, H*W): pure reshape (channel-major, no transpose)
    x = x_nchw.astype(jnp.float32).reshape(b, DIM, hw)
    if pad_needed:
        x = jnp.pad(x, ((0, 0), (0, 0), (0, hw_pad - hw)))

    binc = bin_.astype(jnp.float32).reshape(CODEBOOK_DIM, 1)
    boutc = bout.astype(jnp.float32).reshape(DIM, 1)
    mrow = maskvec.astype(jnp.float32).reshape(1, CODEBOOK_DIM)
    waq, wan, wbq, wbn = _nibble_selectors()

    kernel = functools.partial(_lfq_kernel, hw=hw, tile=tile, pad_needed=pad_needed)

    out_shape = (
        jax.ShapeDtypeStruct((b, DIM, hw_pad), jnp.float32),   # projected quantized
        jax.ShapeDtypeStruct((b, 1, hw_pad), jnp.int32),       # indices (lane-dense)
        jax.ShapeDtypeStruct((b, 1, 1), jnp.float32),          # per-batch entropy sum
        jax.ShapeDtypeStruct((b, 1, 1), jnp.float32),          # per-batch commit sum
        jax.ShapeDtypeStruct((b, 16, 16), jnp.float32),        # per-batch prob sum
    )

    def rep(shape):  # full-array block, replicated across the grid
        return pl.BlockSpec(shape, lambda bi, ti: (0,) * len(shape))

    grid_spec = pltpu.PrefetchScalarGridSpec(
        num_scalar_prefetch=0,
        grid=grid,
        in_specs=[
            pl.BlockSpec((1, DIM, tile), lambda bi, ti: (bi, 0, ti)),  # x tokens
            rep((CODEBOOK_DIM, DIM)),                                  # W_in
            rep((CODEBOOK_DIM, 1)),                                    # b_in (col)
            rep((DIM, CODEBOOK_DIM)),                                  # W_out
            rep((DIM, 1)),                                             # b_out (col)
            rep((1, CODEBOOK_DIM)),                                    # bit-weight row
            rep((16, CODEBOOK_DIM)),                                   # WA (q sel)
            rep((16, CODEBOOK_DIM)),                                   # WA (1-q sel)
            rep((16, CODEBOOK_DIM)),                                   # WB (q sel)
            rep((16, CODEBOOK_DIM)),                                   # WB (1-q sel)
        ],
        out_specs=[
            pl.BlockSpec((1, DIM, tile), lambda bi, ti: (bi, 0, ti)),  # y
            pl.BlockSpec((1, 1, tile), lambda bi, ti: (bi, 0, ti)),    # idx
            pl.BlockSpec((1, 1, 1), lambda bi, ti: (bi, 0, 0)),        # ent partial
            pl.BlockSpec((1, 1, 1), lambda bi, ti: (bi, 0, 0)),        # commit partial
            pl.BlockSpec((1, 16, 16), lambda bi, ti: (bi, 0, 0)),      # prob partial
        ],
        scratch_shapes=[
            pltpu.VMEM((CODEBOOK_DIM, tile), jnp.float32),   # entropy accumulator
            pltpu.VMEM((CODEBOOK_DIM, tile), jnp.float32),   # commit accumulator
            pltpu.VMEM((16, 16), jnp.float32),               # prob outer-product acc
        ],
    )

    y, idx, ent_part, commit_part, prob_part = pl.pallas_call(
        kernel,
        out_shape=out_shape,
        grid_spec=grid_spec,
        compiler_params=pltpu.CompilerParams(
            dimension_semantics=("parallel", "arbitrary"),
            vmem_limit_bytes=32 * 1024 * 1024),
    )(x, win.astype(jnp.float32), binc, wout.astype(jnp.float32), boutc,
      mrow, waq, wan, wbq, wbn)

    y = y[:, :, :hw].reshape(b, DIM, hh, ww)                   # already NCHW
    indices = idx[:, 0, :hw].reshape(b, hh, ww)                # keep_num_codebooks_dim=False

    inv_n = 1.0 / float(n_total)
    pse = jnp.sum(ent_part) * inv_n
    commit = jnp.sum(commit_part) * (inv_n / float(CODEBOOK_DIM))
    avg_prob = jnp.sum(prob_part, axis=0).reshape(CODEBOOK_SIZE) * inv_n
    cbe = -jnp.sum(avg_prob * jnp.log(jnp.maximum(avg_prob, EPS)))
    entropy_aux = pse - DIVERSITY_GAMMA * cbe
    aux_loss = entropy_aux * ENTROPY_LOSS_WEIGHT + commit * COMMITMENT_LOSS_WEIGHT
    return y, indices, aux_loss, (pse, cbe, commit)


def lfq_reference(x_nchw, params):
    """Pure-JAX reference of the PyTorch forward (training mode, c=1)."""
    P = jax.lax.Precision.HIGHEST
    win, bin_, wout, bout, codebook, maskvec = params
    b, d, hh, ww = x_nchw.shape
    x = jnp.transpose(x_nchw.astype(jnp.float32), (0, 2, 3, 1)).reshape(b, hh * ww, d)
    h = jnp.dot(x, win.T, precision=P) + bin_
    quant = jnp.where(h > 0, CODEBOOK_SCALE, -CODEBOOK_SCALE)
    idx = jnp.sum((h > 0).astype(jnp.int32) * maskvec.astype(jnp.int32), axis=-1)
    logits = 2.0 * INV_TEMPERATURE * jnp.einsum("bnd,kd->bnk", h, codebook, precision=P)
    prob = jax.nn.softmax(logits, axis=-1).reshape(-1, CODEBOOK_SIZE)
    pse = (-(prob * jnp.log(jnp.maximum(prob, EPS))).sum(-1)).mean()
    avg_prob = prob.mean(0)
    cbe = -(avg_prob * jnp.log(jnp.maximum(avg_prob, EPS))).sum()
    commit = jnp.mean((h - quant) ** 2)
    y = jnp.dot(quant, wout.T, precision=P) + bout
    y = y.reshape(b, hh, ww, d).transpose(0, 3, 1, 2)
    idx = idx.reshape(b, hh, ww)
    aux = (pse - DIVERSITY_GAMMA * cbe) * ENTROPY_LOSS_WEIGHT + commit * COMMITMENT_LOSS_WEIGHT
    return y, idx, aux, (pse, cbe, commit)


def make_params(key):
    k1, k2, k3, k4 = jax.random.split(key, 4)
    win = jax.random.normal(k1, (CODEBOOK_DIM, DIM), jnp.float32) / np.sqrt(DIM)
    bin_ = 0.01 * jax.random.normal(k2, (CODEBOOK_DIM,), jnp.float32)
    wout = jax.random.normal(k3, (DIM, CODEBOOK_DIM), jnp.float32) / np.sqrt(CODEBOOK_DIM)
    bout = 0.01 * jax.random.normal(k4, (DIM,), jnp.float32)
    # buffers (deterministic, like the PyTorch __init__)
    maskvec = (2 ** jnp.arange(CODEBOOK_DIM - 1, -1, -1)).astype(jnp.int32)
    codes = jnp.arange(CODEBOOK_SIZE, dtype=jnp.int32)[:, None]
    bits = ((codes & maskvec) != 0).astype(jnp.float32)
    codebook = bits * (2.0 * CODEBOOK_SCALE) - CODEBOOK_SCALE
    return win, bin_, wout, bout, codebook, maskvec


def _safe_token_mask(x_nchw, params, thresh=1e-3):
    """Tokens whose projected features are not within float-rounding distance of
    the sign boundary (those have a well-defined quantization)."""
    win, bin_ = params[0], params[1]
    b, d, hh, ww = x_nchw.shape
    x = jnp.transpose(x_nchw.astype(jnp.float32), (0, 2, 3, 1)).reshape(b, hh * ww, d)
    h = jnp.dot(x, win.T, precision=jax.lax.Precision.HIGHEST) + bin_
    return np.asarray(jnp.min(jnp.abs(h), axis=-1) > thresh)      # (b, hw) bool


def _check(x, params, target_tile):
    y, idx, aux, (pse, cbe, commit) = lfq_forward(x, params, target_tile=target_tile)
    jax.block_until_ready((y, idx, aux, pse, cbe, commit))
    yr, idxr, auxr, (pser, cber, commitr) = lfq_reference(x, params)
    b, d, _, _ = x.shape
    safe = _safe_token_mask(x, params)
    yk = np.asarray(y).reshape(b, d, -1).transpose(0, 2, 1)[safe]
    yrf = np.asarray(yr).reshape(b, d, -1).transpose(0, 2, 1)[safe]
    np.testing.assert_allclose(yk, yrf, rtol=1e-4, atol=1e-4)
    np.testing.assert_array_equal(np.asarray(idx).reshape(b, -1)[safe],
                                  np.asarray(idxr).reshape(b, -1)[safe])
    np.testing.assert_allclose(np.asarray(pse), np.asarray(pser), rtol=2e-3, atol=5e-4)
    np.testing.assert_allclose(np.asarray(cbe), np.asarray(cber), rtol=2e-3, atol=5e-4)
    np.testing.assert_allclose(np.asarray(commit), np.asarray(commitr), rtol=2e-4, atol=1e-5)
    np.testing.assert_allclose(np.asarray(aux), np.asarray(auxr), rtol=2e-3, atol=5e-4)


if __name__ == "__main__":
    key = jax.random.PRNGKey(0)
    pkey, xkey, xkey2 = jax.random.split(key, 3)
    params = make_params(pkey)

    # NCHW inputs, small shapes: batch=2, channels=DIM=32, spatial=16x16
    x1 = jax.random.normal(xkey, (2, DIM, 16, 16), jnp.float32)
    # non-128-divisible spatial size exercises the padding/masking path
    x2 = jax.random.normal(xkey2, (1, DIM, 10, 10), jnp.float32)

    _check(x1, params, TARGET_TILE_N)   # single token tile per batch element
    _check(x1, params, 128)             # multi-tile accumulation per batch element
    _check(x2, params, TARGET_TILE_N)   # padded / masked tail tokens

    print("KERNEL_OK")
</pallas_src>

<mosaic_0001>
module attributes {stable_mosaic.version = 11 : i64} {
  func.func @_lfq_kernel(%arg0: i32, %arg1: i32, %arg2: memref<1x32x256xf32, #tpu.memory_space<vmem>>, %arg3: memref<8x32xf32, #tpu.memory_space<vmem>>, %arg4: memref<8x1xf32, #tpu.memory_space<vmem>>, %arg5: memref<32x8xf32, #tpu.memory_space<vmem>>, %arg6: memref<32x1xf32, #tpu.memory_space<vmem>>, %arg7: memref<1x8xf32, #tpu.memory_space<vmem>>, %arg8: memref<16x8xf32, #tpu.memory_space<vmem>>, %arg9: memref<16x8xf32, #tpu.memory_space<vmem>>, %arg10: memref<16x8xf32, #tpu.memory_space<vmem>>, %arg11: memref<16x8xf32, #tpu.memory_space<vmem>>, %arg12: memref<1x32x256xf32, #tpu.memory_space<vmem>>, %arg13: memref<1x1x256xi32, #tpu.memory_space<vmem>>, %arg14: memref<1x1x1xf32, #tpu.memory_space<vmem>>, %arg15: memref<1x1x1xf32, #tpu.memory_space<vmem>>, %arg16: memref<1x16x16xf32, #tpu.memory_space<vmem>>, %arg17: memref<8x256xf32, #tpu.memory_space<vmem>>, %arg18: memref<8x256xf32, #tpu.memory_space<vmem>>, %arg19: memref<16x16xf32, #tpu.memory_space<vmem>>) attributes {dimension_semantics = [#tpu.dimension_semantics<parallel>, #tpu.dimension_semantics<arbitrary>], iteration_bounds = array<i64: 2, 1>, scalar_prefetch = 0 : i64, scratch_operands = 3 : i64, tpu.core_type = #tpu.core_type<tc>, window_params = [{transform_indices = @transform_0, window_bounds = array<i64: 1, 32, 256>}, {pipeline_mode = #tpu.pipeline_mode<synchronous>, transform_indices = @transform_1, window_bounds = array<i64: 8, 32>}, {pipeline_mode = #tpu.pipeline_mode<synchronous>, transform_indices = @transform_2, window_bounds = array<i64: 8, 1>}, {pipeline_mode = #tpu.pipeline_mode<synchronous>, transform_indices = @transform_3, window_bounds = array<i64: 32, 8>}, {pipeline_mode = #tpu.pipeline_mode<synchronous>, transform_indices = @transform_4, window_bounds = array<i64: 32, 1>}, {pipeline_mode = #tpu.pipeline_mode<synchronous>, transform_indices = @transform_5, window_bounds = array<i64: 1, 8>}, {pipeline_mode = #tpu.pipeline_mode<synchronous>, transform_indices = @transform_6, window_bounds = array<i64: 16, 8>}, {pipeline_mode = #tpu.pipeline_mode<synchronous>, transform_indices = @transform_7, window_bounds = array<i64: 16, 8>}, {pipeline_mode = #tpu.pipeline_mode<synchronous>, transform_indices = @transform_8, window_bounds = array<i64: 16, 8>}, {pipeline_mode = #tpu.pipeline_mode<synchronous>, transform_indices = @transform_9, window_bounds = array<i64: 16, 8>}, {transform_indices = @transform_10, window_bounds = array<i64: 1, 32, 256>}, {transform_indices = @transform_11, window_bounds = array<i64: 1, 1, 256>}, {transform_indices = @transform_12, window_bounds = array<i64: 1, 1, 1>}, {transform_indices = @transform_13, window_bounds = array<i64: 1, 1, 1>}, {transform_indices = @transform_14, window_bounds = array<i64: 1, 16, 16>}]} {
    %c0_i32 = arith.constant 0 : i32
    %0 = arith.cmpi eq, %arg1, %c0_i32 : i32
    %1 = arith.extui %0 : i1 to i32
    %c0_i32_0 = arith.constant 0 : i32
    %2 = arith.cmpi ne, %1, %c0_i32_0 : i32
    scf.if %2 {
      %cst_58 = arith.constant 0.000000e+00 : f32
      %81 = vector.broadcast %cst_58 : f32 to vector<8x256xf32>
      %c0_59 = arith.constant 0 : index
      %c0_60 = arith.constant 0 : index
      %82 = vector.load %arg17[%c0_59, %c0_60] : memref<8x256xf32, #tpu.memory_space<vmem>>, vector<8x256xf32>
      tpu.vector_store %arg17[%c0_59, %c0_60], %81 {strides = array<i32>} : memref<8x256xf32, #tpu.memory_space<vmem>>, vector<8x256xf32>,
      %cst_61 = arith.constant 0.000000e+00 : f32
      %83 = vector.broadcast %cst_61 : f32 to vector<8x256xf32>
      %c0_62 = arith.constant 0 : index
      %c0_63 = arith.constant 0 : index
      %84 = vector.load %arg18[%c0_62, %c0_63] : memref<8x256xf32, #tpu.memory_space<vmem>>, vector<8x256xf32>
      tpu.vector_store %arg18[%c0_62, %c0_63], %83 {strides = array<i32>} : memref<8x256xf32, #tpu.memory_space<vmem>>, vector<8x256xf32>,
      %cst_64 = arith.constant 0.000000e+00 : f32
      %85 = vector.broadcast %cst_64 : f32 to vector<16x16xf32>
      %c0_65 = arith.constant 0 : index
      %c0_66 = arith.constant 0 : index
      %86 = vector.load %arg19[%c0_65, %c0_66] : memref<16x16xf32, #tpu.memory_space<vmem>>, vector<16x16xf32>
      tpu.vector_store %arg19[%c0_65, %c0_66], %85 {strides = array<i32>} : memref<16x16xf32, #tpu.memory_space<vmem>>, vector<16x16xf32>,
    } else {
    }
    %c0 = arith.constant 0 : index
    %c0_1 = arith.constant 0 : index
    %c0_2 = arith.constant 0 : index
    %3 = vector.load %arg2[%c0, %c0_1, %c0_2] : memref<1x32x256xf32, #tpu.memory_space<vmem>>, vector<1x32x256xf32>
    %4 = vector.shape_cast %3 : vector<1x32x256xf32> to vector<32x256xf32>
    %c0_3 = arith.constant 0 : index
    %c0_4 = arith.constant 0 : index
    %5 = vector.load %arg3[%c0_3, %c0_4] : memref<8x32xf32, #tpu.memory_space<vmem>>, vector<8x32xf32>
    %cst = arith.constant dense<0.000000e+00> : vector<8x256xf32>
    %6 = tpu.matmul %5, %4, %cst {dimension_numbers = #tpu.dot_dimension_numbers<[1], [0], [0], [1], [0, 0, 1, 1], [], []>} : vector<8x32xf32>, vector<32x256xf32>, vector<8x256xf32> -> vector<8x256xf32>
    %c0_5 = arith.constant 0 : index
    %c0_6 = arith.constant 0 : index
    %7 = vector.load %arg4[%c0_5, %c0_6] : memref<8x1xf32, #tpu.memory_space<vmem>>, vector<8x1xf32>
    %8 = vector.broadcast %7 : vector<8x1xf32> to vector<8x256xf32>
    %9 = arith.addf %6, %8 : vector<8x256xf32>
    %cst_7 = arith.constant 0.000000e+00 : f32
    %10 = vector.broadcast %cst_7 : f32 to vector<8x256xf32>
    %11 = arith.cmpf ogt, %9, %10 : vector<8x256xf32>
    %12 = arith.extui %11 : vector<8x256xi1> to vector<8x256xi32>
    %13 = arith.sitofp %12 : vector<8x256xi32> to vector<8x256xf32>
    %cst_8 = arith.constant 2.000000e+00 : f32
    %14 = vector.broadcast %cst_8 : f32 to vector<8x256xf32>
    %15 = arith.mulf %13, %14 : vector<8x256xf32>
    %cst_9 = arith.constant 1.000000e+00 : f32
    %16 = vector.broadcast %cst_9 : f32 to vector<8x256xf32>
    %17 = arith.subf %15, %16 : vector<8x256xf32>
    %c0_10 = arith.constant 0 : index
    %c0_11 = arith.constant 0 : index
    %18 = vector.load %arg7[%c0_10, %c0_11] : memref<1x8xf32, #tpu.memory_space<vmem>>, vector<1x8xf32>
    %cst_12 = arith.constant dense<0.000000e+00> : vector<1x256xf32>
    %19 = tpu.matmul %18, %13, %cst_12 {dimension_numbers = #tpu.dot_dimension_numbers<[1], [0], [0], [1], [0, 0, 1, 1], [], []>} : vector<1x8xf32>, vector<8x256xf32>, vector<1x256xf32> -> vector<1x256xf32>
    %cst_13 = arith.constant 5.000000e-01 : f32
    %20 = vector.broadcast %cst_13 : f32 to vector<1x256xf32>
    %21 = arith.addf %19, %20 : vector<1x256xf32>
    %22 = arith.fptosi %21 : vector<1x256xf32> to vector<1x256xi32>
    %c0_14 = arith.constant 0 : index
    %c0_15 = arith.constant 0 : index
    %c0_16 = arith.constant 0 : index
    %23 = vector.load %arg13[%c0_14, %c0_15, %c0_16] : memref<1x1x256xi32, #tpu.memory_space<vmem>>, vector<1x1x256xi32>
    %24 = vector.shape_cast %23 : vector<1x1x256xi32> to vector<1x256xi32>
    %25 = vector.shape_cast %22 : vector<1x256xi32> to vector<1x1x256xi32>
    tpu.vector_store %arg13[%c0_14, %c0_15, %c0_16], %25 {strides = array<i32>} : memref<1x1x256xi32, #tpu.memory_space<vmem>>, vector<1x1x256xi32>,
    %c0_17 = arith.constant 0 : index
    %c0_18 = arith.constant 0 : index
    %26 = vector.load %arg5[%c0_17, %c0_18] : memref<32x8xf32, #tpu.memory_space<vmem>>, vector<32x8xf32>
    %cst_19 = arith.constant dense<0.000000e+00> : vector<32x256xf32>
    %27 = tpu.matmul %26, %17, %cst_19 {dimension_numbers = #tpu.dot_dimension_numbers<[1], [0], [0], [1], [0, 0, 1, 1], [], []>} : vector<32x8xf32>, vector<8x256xf32>, vector<32x256xf32> -> vector<32x256xf32>
    %c0_20 = arith.constant 0 : index
    %c0_21 = arith.constant 0 : index
    %28 = vector.load %arg6[%c0_20, %c0_21] : memref<32x1xf32, #tpu.memory_space<vmem>>, vector<32x1xf32>
    %29 = vector.broadcast %28 : vector<32x1xf32> to vector<32x256xf32>
    %30 = arith.addf %27, %29 : vector<32x256xf32>
    %c0_22 = arith.constant 0 : index
    %c0_23 = arith.constant 0 : index
    %c0_24 = arith.constant 0 : index
    %31 = vector.load %arg12[%c0_22, %c0_23, %c0_24] : memref<1x32x256xf32, #tpu.memory_space<vmem>>, vector<1x32x256xf32>
    %32 = vector.shape_cast %31 : vector<1x32x256xf32> to vector<32x256xf32>
    %33 = vector.shape_cast %30 : vector<32x256xf32> to vector<1x32x256xf32>
    tpu.vector_store %arg12[%c0_22, %c0_23, %c0_24], %33 {strides = array<i32>} : memref<1x32x256xf32, #tpu.memory_space<vmem>>, vector<1x32x256xf32>,
    %cst_25 = arith.constant 4.000000e+02 : f32
    %34 = vector.broadcast %cst_25 : f32 to vector<8x256xf32>
    %35 = arith.mulf %34, %9 : vector<8x256xf32>
    %36 = math.absf %35 : vector<8x256xf32>
    %cst_26 = arith.constant 0.000000e+00 : f32
    %37 = vector.broadcast %cst_26 : f32 to vector<8x256xf32>
    %38 = arith.subf %37, %36 : vector<8x256xf32>
    %39 = math.exp %38 : vector<8x256xf32>
    %cst_27 = arith.constant 1.000000e+00 : f32
    %40 = vector.broadcast %cst_27 : f32 to vector<8x256xf32>
    %41 = arith.addf %40, %39 : vector<8x256xf32>
    %42 = math.log %41 : vector<8x256xf32>
    %43 = arith.divf %39, %41 : vector<8x256xf32>
    %44 = arith.mulf %36, %43 : vector<8x256xf32>
    %45 = arith.addf %42, %44 : vector<8x256xf32>
    %cst_28 = arith.constant 0.000000e+00 : f32
    %46 = vector.broadcast %cst_28 : f32 to vector<8x256xf32>
    %47 = arith.minimumf %35, %46 : vector<8x256xf32>
    %48 = arith.subf %47, %42 : vector<8x256xf32>
    %cst_29 = arith.constant 0.000000e+00 : f32
    %49 = vector.broadcast %cst_29 : f32 to vector<8x256xf32>
    %50 = arith.maximumf %35, %49 : vector<8x256xf32>
    %cst_30 = arith.constant 0.000000e+00 : f32
    %51 = vector.broadcast %cst_30 : f32 to vector<8x256xf32>
    %52 = arith.subf %51, %50 : vector<8x256xf32>
    %53 = arith.subf %52, %42 : vector<8x256xf32>
    %54 = arith.subf %9, %17 : vector<8x256xf32>
    %55 = arith.mulf %54, %54 : vector<8x256xf32>
    %c0_31 = arith.constant 0 : index
    %c0_32 = arith.constant 0 : index
    %56 = vector.load %arg17[%c0_31, %c0_32] : memref<8x256xf32, #tpu.memory_space<vmem>>, vector<8x256xf32>
    %57 = arith.addf %56, %45 : vector<8x256xf32>
    %c0_33 = arith.constant 0 : index
    %c0_34 = arith.constant 0 : index
    %58 = vector.load %arg17[%c0_33, %c0_34] : memref<8x256xf32, #tpu.memory_space<vmem>>, vector<8x256xf32>
    tpu.vector_store %arg17[%c0_33, %c0_34], %57 {strides = array<i32>} : memref<8x256xf32, #tpu.memory_space<vmem>>, vector<8x256xf32>,
    %c0_35 = arith.constant 0 : index
    %c0_36 = arith.constant 0 : index
    %59 = vector.load %arg18[%c0_35, %c0_36] : memref<8x256xf32, #tpu.memory_space<vmem>>, vector<8x256xf32>
    %60 = arith.addf %59, %55 : vector<8x256xf32>
    %c0_37 = arith.constant 0 : index
    %c0_38 = arith.constant 0 : index
    %61 = vector.load %arg18[%c0_37, %c0_38] : memref<8x256xf32, #tpu.memory_space<vmem>>, vector<8x256xf32>
    tpu.vector_store %arg18[%c0_37, %c0_38], %60 {strides = array<i32>} : memref<8x256xf32, #tpu.memory_space<vmem>>, vector<8x256xf32>,
    %c0_39 = arith.constant 0 : index
    %c0_40 = arith.constant 0 : index
    %62 = vector.load %arg8[%c0_39, %c0_40] : memref<16x8xf32, #tpu.memory_space<vmem>>, vector<16x8xf32>
    %cst_41 = arith.constant dense<0.000000e+00> : vector<16x256xf32>
    %63 = tpu.matmul %62, %48, %cst_41 {dimension_numbers = #tpu.dot_dimension_numbers<[1], [0], [0], [1], [0, 0, 1, 1], [], []>} : vector<16x8xf32>, vector<8x256xf32>, vector<16x256xf32> -> vector<16x256xf32>
    %c0_42 = arith.constant 0 : index
    %c0_43 = arith.constant 0 : index
    %64 = vector.load %arg9[%c0_42, %c0_43] : memref<16x8xf32, #tpu.memory_space<vmem>>, vector<16x8xf32>
    %cst_44 = arith.constant dense<0.000000e+00> : vector<16x256xf32>
    %65 = tpu.matmul %64, %53, %cst_44 {dimension_numbers = #tpu.dot_dimension_numbers<[1], [0], [0], [1], [0, 0, 1, 1], [], []>} : vector<16x8xf32>, vector<8x256xf32>, vector<16x256xf32> -> vector<16x256xf32>
    %66 = arith.addf %63, %65 : vector<16x256xf32>
    %c0_45 = arith.constant 0 : index
    %c0_46 = arith.constant 0 : index
    %67 = vector.load %arg10[%c0_45, %c0_46] : memref<16x8xf32, #tpu.memory_space<vmem>>, vector<16x8xf32>
    %cst_47 = arith.constant dense<0.000000e+00> : vector<16x256xf32>
    %68 = tpu.matmul %67, %48, %cst_47 {dimension_numbers = #tpu.dot_dimension_numbers<[1], [0], [0], [1], [0, 0, 1, 1], [], []>} : vector<16x8xf32>, vector<8x256xf32>, vector<16x256xf32> -> vector<16x256xf32>
    %c0_48 = arith.constant 0 : index
    %c0_49 = arith.constant 0 : index
    %69 = vector.load %arg11[%c0_48, %c0_49] : memref<16x8xf32, #tpu.memory_space<vmem>>, vector<16x8xf32>
    %cst_50 = arith.constant dense<0.000000e+00> : vector<16x256xf32>
    %70 = tpu.matmul %69, %53, %cst_50 {dimension_numbers = #tpu.dot_dimension_numbers<[1], [0], [0], [1], [0, 0, 1, 1], [], []>} : vector<16x8xf32>, vector<8x256xf32>, vector<16x256xf32> -> vector<16x256xf32>
    %71 = arith.addf %68, %70 : vector<16x256xf32>
    %72 = math.exp %66 : vector<16x256xf32>
    %73 = math.exp %71 : vector<16x256xf32>
    %c0_51 = arith.constant 0 : index
    %c0_52 = arith.constant 0 : index
    %74 = vector.load %arg19[%c0_51, %c0_52] : memref<16x16xf32, #tpu.memory_space<vmem>>, vector<16x16xf32>
    %cst_53 = arith.constant dense<0.000000e+00> : vector<16x16xf32>
    %75 = tpu.matmul %72, %73, %cst_53 {dimension_numbers = #tpu.dot_dimension_numbers<[1], [1], [0], [0], [0, 0, 1, 0], [], []>} : vector<16x256xf32>, vector<16x256xf32>, vector<16x16xf32> -> vector<16x16xf32>
    %76 = arith.addf %74, %75 : vector<16x16xf32>
    %c0_54 = arith.constant 0 : index
    %c0_55 = arith.constant 0 : index
    %77 = vector.load %arg19[%c0_54, %c0_55] : memref<16x16xf32, #tpu.memory_space<vmem>>, vector<16x16xf32>
    tpu.vector_store %arg19[%c0_54, %c0_55], %76 {strides = array<i32>} : memref<16x16xf32, #tpu.memory_space<vmem>>, vector<16x16xf32>,
    %c0_i32_56 = arith.constant 0 : i32
    %78 = arith.cmpi eq, %arg1, %c0_i32_56 : i32
    %79 = arith.extui %78 : i1 to i32
    %c0_i32_57 = arith.constant 0 : i32
    %80 = arith.cmpi ne, %79, %c0_i32_57 : i32
    scf.if %80 {
      %c0_58 = arith.constant 0 : index
      %c0_59 = arith.constant 0 : index
      %81 = vector.load %arg17[%c0_58, %c0_59] : memref<8x256xf32, #tpu.memory_space<vmem>>, vector<8x256xf32>
      %cst_60 = arith.constant dense<0.000000e+00> : vector<8xf32>
      %82 = vector.multi_reduction <add>, %81, %cst_60 [1] : vector<8x256xf32> to vector<8xf32>
      %83 = vector.shape_cast %82 : vector<8xf32> to vector<8x1xf32>
      %cst_61 = arith.constant dense<0.000000e+00> : vector<1xf32>
      %84 = vector.multi_reduction <add>, %83, %cst_61 [0] : vector<8x1xf32> to vector<1xf32>
      %85 = vector.shape_cast %84 : vector<1xf32> to vector<1x1xf32>
      %c0_62 = arith.constant 0 : index
      %c0_63 = arith.constant 0 : index
      %86 = vector.load %arg18[%c0_62, %c0_63] : memref<8x256xf32, #tpu.memory_space<vmem>>, vector<8x256xf32>
      %cst_64 = arith.constant dense<0.000000e+00> : vector<8xf32>
      %87 = vector.multi_reduction <add>, %86, %cst_64 [1] : vector<8x256xf32> to vector<8xf32>
      %88 = vector.shape_cast %87 : vector<8xf32> to vector<8x1xf32>
      %cst_65 = arith.constant dense<0.000000e+00> : vector<1xf32>
      %89 = vector.multi_reduction <add>, %88, %cst_65 [0] : vector<8x1xf32> to vector<1xf32>
      %90 = vector.shape_cast %89 : vector<1xf32> to vector<1x1xf32>
      %c0_66 = arith.constant 0 : index
      %c0_67 = arith.constant 0 : index
      %c0_68 = arith.constant 0 : index
      %91 = vector.load %arg14[%c0_66, %c0_67, %c0_68] : memref<1x1x1xf32, #tpu.memory_space<vmem>>, vector<1x1x1xf32>
      %92 = vector.shape_cast %91 : vector<1x1x1xf32> to vector<1x1xf32>
      %93 = vector.shape_cast %85 : vector<1x1xf32> to vector<1x1x1xf32>
      tpu.vector_store %arg14[%c0_66, %c0_67, %c0_68], %93 {strides = array<i32>} : memref<1x1x1xf32, #tpu.memory_space<vmem>>, vector<1x1x1xf32>,
      %c0_69 = arith.constant 0 : index
      %c0_70 = arith.constant 0 : index
      %c0_71 = arith.constant 0 : index
      %94 = vector.load %arg15[%c0_69, %c0_70, %c0_71] : memref<1x1x1xf32, #tpu.memory_space<vmem>>, vector<1x1x1xf32>
      %95 = vector.shape_cast %94 : vector<1x1x1xf32> to vector<1x1xf32>
      %96 = vector.shape_cast %90 : vector<1x1xf32> to vector<1x1x1xf32>
      tpu.vector_store %arg15[%c0_69, %c0_70, %c0_71], %96 {strides = array<i32>} : memref<1x1x1xf32, #tpu.memory_space<vmem>>, vector<1x1x1xf32>,
      %c0_72 = arith.constant 0 : index
      %c0_73 = arith.constant 0 : index
      %97 = vector.load %arg19[%c0_72, %c0_73] : memref<16x16xf32, #tpu.memory_space<vmem>>, vector<16x16xf32>
      %c0_74 = arith.constant 0 : index
      %c0_75 = arith.constant 0 : index
      %c0_76 = arith.constant 0 : index
      %98 = vector.load %arg16[%c0_74, %c0_75, %c0_76] : memref<1x16x16xf32, #tpu.memory_space<vmem>>, vector<1x16x16xf32>
      %99 = vector.shape_cast %98 : vector<1x16x16xf32> to vector<16x16xf32>
      %100 = vector.shape_cast %97 : vector<16x16xf32> to vector<1x16x16xf32>
      tpu.vector_store %arg16[%c0_74, %c0_75, %c0_76], %100 {strides = array<i32>} : memref<1x16x16xf32, #tpu.memory_space<vmem>>, vector<1x16x16xf32>,
    } else {
    }
    return
  }
  func.func @transform_0(%arg0: i32, %arg1: i32) -> (i32, i32, i32) {
    %c0_i32 = arith.constant 0 : i32
    %c0_i32_0 = arith.constant 0 : i32
    return %arg0, %c0_i32, %arg1 : i32, i32, i32
  }
  func.func @transform_1(%arg0: i32, %arg1: i32) -> (i32, i32) {
    %c0_i32 = arith.constant 0 : i32
    %c0_i32_0 = arith.constant 0 : i32
    %c0_i32_1 = arith.constant 0 : i32
    return %c0_i32, %c0_i32_0 : i32, i32
  }
  func.func @transform_2(%arg0: i32, %arg1: i32) -> (i32, i32) {
    %c0_i32 = arith.constant 0 : i32
    %c0_i32_0 = arith.constant 0 : i32
    %c0_i32_1 = arith.constant 0 : i32
    return %c0_i32, %c0_i32_0 : i32, i32
  }
  func.func @transform_3(%arg0: i32, %arg1: i32) -> (i32, i32) {
    %c0_i32 = arith.constant 0 : i32
    %c0_i32_0 = arith.constant 0 : i32
    %c0_i32_1 = arith.constant 0 : i32
    return %c0_i32, %c0_i32_0 : i32, i32
  }
  func.func @transform_4(%arg0: i32, %arg1: i32) -> (i32, i32) {
    %c0_i32 = arith.constant 0 : i32
    %c0_i32_0 = arith.constant 0 : i32
    %c0_i32_1 = arith.constant 0 : i32
    return %c0_i32, %c0_i32_0 : i32, i32
  }
  func.func @transform_5(%arg0: i32, %arg1: i32) -> (i32, i32) {
    %c0_i32 = arith.constant 0 : i32
    %c0_i32_0 = arith.constant 0 : i32
    %c0_i32_1 = arith.constant 0 : i32
    return %c0_i32, %c0_i32_0 : i32, i32
  }
  func.func @transform_6(%arg0: i32, %arg1: i32) -> (i32, i32) {
    %c0_i32 = arith.constant 0 : i32
    %c0_i32_0 = arith.constant 0 : i32
    %c0_i32_1 = arith.constant 0 : i32
    return %c0_i32, %c0_i32_0 : i32, i32
  }
  func.func @transform_7(%arg0: i32, %arg1: i32) -> (i32, i32) {
    %c0_i32 = arith.constant 0 : i32
    %c0_i32_0 = arith.constant 0 : i32
    %c0_i32_1 = arith.constant 0 : i32
    return %c0_i32, %c0_i32_0 : i32, i32
  }
  func.func @transform_8(%arg0: i32, %arg1: i32) -> (i32, i32) {
    %c0_i32 = arith.constant 0 : i32
    %c0_i32_0 = arith.constant 0 : i32
    %c0_i32_1 = arith.constant 0 : i32
    return %c0_i32, %c0_i32_0 : i32, i32
  }
  func.func @transform_9(%arg0: i32, %arg1: i32) -> (i32, i32) {
    %c0_i32 = arith.constant 0 : i32
    %c0_i32_0 = arith.constant 0 : i32
    %c0_i32_1 = arith.constant 0 : i32
    return %c0_i32, %c0_i32_0 : i32, i32
  }
  func.func @transform_10(%arg0: i32, %arg1: i32) -> (i32, i32, i32) {
    %c0_i32 = arith.constant 0 : i32
    %c0_i32_0 = arith.constant 0 : i32
    return %arg0, %c0_i32, %arg1 : i32, i32, i32
  }
  func.func @transform_11(%arg0: i32, %arg1: i32) -> (i32, i32, i32) {
    %c0_i32 = arith.constant 0 : i32
    %c0_i32_0 = arith.constant 0 : i32
    return %arg0, %c0_i32, %arg1 : i32, i32, i32
  }
  func.func @transform_12(%arg0: i32, %arg1: i32) -> (i32, i32, i32) {
    %c0_i32 = arith.constant 0 : i32
    %c0_i32_0 = arith.constant 0 : i32
    %c0_i32_1 = arith.constant 0 : i32
    return %arg0, %c0_i32, %c0_i32_0 : i32, i32, i32
  }
  func.func @transform_13(%arg0: i32, %arg1: i32) -> (i32, i32, i32) {
    %c0_i32 = arith.constant 0 : i32
    %c0_i32_0 = arith.constant 0 : i32
    %c0_i32_1 = arith.constant 0 : i32
    return %arg0, %c0_i32, %c0_i32_0 : i32, i32, i32
  }
  func.func @transform_14(%arg0: i32, %arg1: i32) -> (i32, i32, i32) {
    %c0_i32 = arith.constant 0 : i32
    %c0_i32_0 = arith.constant 0 : i32
    %c0_i32_1 = arith.constant 0 : i32
    return %arg0, %c0_i32, %c0_i32_0 : i32, i32, i32
  }
}

</mosaic_0001>

<llo_original>
// kernel: tpu_custom_call.1
$region0: #{tpu_custom_call.1}
  #allocation0 [shape = 'u32[]', space=smem, size = 0x4, offset = 0x4, fixed_abs, tag = 'smem constant byte address 0x4 - core index']
  #allocation1 [shape = 'u32[144,128]{1,0:T(1,128)}', space=vmem, size = 0x12000, scoped, tag = 'internal scratch']
  #allocation2 [shape = 'f32[8,256]{1,0:T(8,128)}', space=vmem, size = 0x2000, scoped, tag = 'scratch operand']
  #allocation3 [shape = 'f32[8,256]{1,0:T(8,128)}', space=vmem, size = 0x2000, scoped, tag = 'scratch operand']
  #allocation4 [shape = 'f32[16,16]{1,0:T(8,128)}', space=vmem, size = 0x2000, scoped, tag = 'scratch operand']
  %s0 = inlined_call_operand.vmem [shape: f32[2,32,256], index: 0, kind: input, shape index: {}]
  %s1 = inlined_call_operand.vmem [shape: f32[8,32], index: 1, kind: input, shape index: {}]
  %s2 = inlined_call_operand.vmem [shape: f32[8,1], index: 2, kind: input, shape index: {}]
  %s3 = inlined_call_operand.vmem [shape: f32[32,8], index: 3, kind: input, shape index: {}]
  %s4 = inlined_call_operand.vmem [shape: f32[32,1], index: 4, kind: input, shape index: {}]
  %s5 = inlined_call_operand.vmem [shape: f32[1,8], index: 5, kind: input, shape index: {}]
  %s6 = inlined_call_operand.vmem [shape: f32[16,8], index: 6, kind: input, shape index: {}]
  %s7 = inlined_call_operand.vmem [shape: f32[16,8], index: 7, kind: input, shape index: {}]
  %s8 = inlined_call_operand.vmem [shape: f32[16,8], index: 8, kind: input, shape index: {}]
  %s9 = inlined_call_operand.vmem [shape: f32[16,8], index: 9, kind: input, shape index: {}]
  %s10 = inlined_call_operand.hbm [shape: f32[2,32,256], index: 10, kind: output, shape index: {0}]
  %s11 = inlined_call_operand.hbm [shape: s32[2,1,256], index: 11, kind: output, shape index: {1}]
  %s12 = inlined_call_operand.vmem [shape: f32[2,1,1], index: 12, kind: output, shape index: {2}]
  %s13 = inlined_call_operand.vmem [shape: f32[2,1,1], index: 13, kind: output, shape index: {3}]
  %s14 = inlined_call_operand.hbm [shape: f32[2,16,16], index: 14, kind: output, shape index: {4}]
  %15 = xla_tuple %s10, %s11, %s12, %s13, %s14
  %s16 = sld [smem:[#allocation0]]
  $region113: #{tpu_custom_call.1} parent=0
    _
  %s18 = ssub.s32 1, %s16
  %s19 = scalar_select 0, %s18, %s16
  $region1: #{tpu_custom_call.1} parent=0
    #allocation5 [shape = 'u8[65536]{0}', space=vmem, size = 0x10000, scoped, tag = 'output window, operand 0']
    #allocation6 [shape = 's32[2]{0}', space=sflag, size = 0x8, scoped, tag = 'scoped memory for tpu_custom_call.1']
    #allocation7 [shape = 'u8[2048]{0}', space=vmem, size = 0x800, scoped, tag = 'output window, operand 1']
    #allocation8 [shape = 's32[2]{0}', space=sflag, size = 0x8, scoped, tag = 'scoped memory for tpu_custom_call.1']
    #allocation9 [shape = 'u8[16384]{0}', space=vmem, size = 0x4000, scoped, tag = 'output window, operand 4']
    %20 = vsyncpa [#allocation6], 0
    %s21 = scalar_lea.sflag [#allocation6], 1
    %22 = vsyncpa %s21, 0
    %23 = vsyncpa [#allocation8], 0
    %s24 = scalar_lea.sflag [#allocation8], 1
    %25 = vsyncpa %s24, 0
    loop: start=0, step=1, limit=4
    $region2: #{tpu_custom_call.1} parent=1 // loop_pre_header
      _
    $region3: #{tpu_custom_call.1} parent=1 // loop_header
      %s27 = sphi 0, %s31
      %p28 = scmp.ge.s32.totalorder %s27, 4
      %s34 = sphi 0, %s46
      %s35 = sphi 0, %s42
      %s36 = sphi 0, %s34
      %s37 = sphi 0, %s35
      %s38 = sphi 0, %s36
      %s39 = sphi 0, %s37
      %s51 = sphi 0, %s53
      %s54 = sphi 0, %s51
      %s55 = sphi 0, %s54
      %s71 = sphi 0, %s55
      %s75 = sphi 0, %s75
      %s77 = sphi 0, %s75
      %s78 = sphi 0, %s77
      %s92 = sphi 0, %s78
      %s96 = sphi 0, %s96
      %s98 = sphi 0, %s96
      %s99 = sphi 0, %s98
      %s113 = sphi 0, %s99
      %s117 = sphi 0, %s117
      %s119 = sphi 0, %s117
      %s120 = sphi 0, %s119
      %s134 = sphi 0, %s120
      %s138 = sphi 0, %s138
      %s140 = sphi 0, %s138
      %s141 = sphi 0, %s140
      %s155 = sphi 0, %s141
      %s159 = sphi 0, %s159
      %s161 = sphi 0, %s159
      %s162 = sphi 0, %s161
      %s176 = sphi 0, %s162
      %s180 = sphi 0, %s180
      %s182 = sphi 0, %s180
      %s183 = sphi 0, %s182
      %s197 = sphi 0, %s183
      %s201 = sphi 0, %s201
      %s203 = sphi 0, %s201
      %s204 = sphi 0, %s203
      %s218 = sphi 0, %s204
      %s222 = sphi 0, %s222
      %s224 = sphi 0, %s222
      %s225 = sphi 0, %s224
      %s239 = sphi 0, %s225
      %s243 = sphi 0, %s243
      %s245 = sphi 0, %s243
      %s246 = sphi 0, %s245
      %s260 = sphi 0, %s246
      %s268 = sphi 0, %s270
      %s271 = sphi 0, %s268
      %s272 = sphi 0, %s271
      %s288 = sphi 0, %s272
      %s296 = sphi 0, %s298
      %s299 = sphi 0, %s296
      %s300 = sphi 0, %s299
      %s316 = sphi 0, %s300
      %s322 = sphi 0, %s324
      %s325 = sphi 0, %s322
      %s326 = sphi 0, %s325
      %s342 = sphi 0, %s326
      %s348 = sphi 0, %s350
      %s351 = sphi 0, %s348
      %s352 = sphi 0, %s351
      %s368 = sphi 0, %s352
      %s374 = sphi 0, %s376
      %s377 = sphi 0, %s374
      %s378 = sphi 0, %s377
      %s394 = sphi 0, %s378
    $region4: #{tpu_custom_call.1} parent=1 // loop_header_branch
      %30 = sbr.rel (%p28) target = $region8
    $region5: #{tpu_custom_call.1} parent=1 // loop_body
      %s32 = ssub.s32 %s27, 1
      %s33 = ssub.s32 %s27, 2
      %s40 = sadd.s32 1, %s35
      %p41 = scmp.ge.s32.totalorder %s40, 1
      %s42 = scalar_select %p41, 0, %s40
      %s43 = sadd.s32 1, %s34
      %s44 = scalar_select %p41, %s43, %s34
      %p45 = scmp.ge.s32.totalorder %s44, 2
      %s46 = scalar_select %p45, 0, %s44
      %s47 = ssub.s32 %s34, %s46
      %s48 = ssub.s32 %s35, %s42
      %s49 = sor.u32 %s47, %s48
      %p50 = scmp.eq.s32.totalorder %s49, 0
      %s52 = sadd.s32 %s51, 1
      %s53 = scalar_select %p50, %s51, %s52
      %p56 = pneg %p50
      %p57 = scmp.eq.s32.totalorder %s27, 1
      %p58 = por %p56, %p57
      %p59 = scmp.ne.s32.totalorder %s51, %s54
      %p60 = scmp.eq.s32.totalorder %s27, 0
      %p61 = por %p59, %p60
      %p62 = scmp.ne.s32.totalorder %s51, %s54
      %p63 = scmp.eq.s32.totalorder %s32, 1
      %p64 = por %p62, %p63
      %p65 = scmp.ne.s32.totalorder %s54, %s55
      %p66 = scmp.eq.s32.totalorder %s32, 0
      %p67 = por %p65, %p66
      %p68 = scmp.ne.s32.totalorder %s54, %s55
      %p69 = scmp.eq.s32.totalorder %s33, 1
      %p70 = por %p68, %p69
      %p72 = scmp.ne.s32.totalorder %s55, %s71
      %p73 = scmp.eq.s32.totalorder %s33, 0
      %p74 = por %p72, %p73
      %s76 = sadd.s32 %s75, 1
      %p79 = scmp.eq.s32.totalorder %s27, 1
      %p80 = scmp.ne.s32.totalorder %s75, %s77
      %p81 = scmp.eq.s32.totalorder %s27, 0
      %p82 = por %p80, %p81
      %p83 = scmp.ne.s32.totalorder %s75, %s77
      %p84 = scmp.eq.s32.totalorder %s32, 1
      %p85 = por %p83, %p84
      %p86 = scmp.ne.s32.totalorder %s77, %s78
      %p87 = scmp.eq.s32.totalorder %s32, 0
      %p88 = por %p86, %p87
      %p89 = scmp.ne.s32.totalorder %s77, %s78
      %p90 = scmp.eq.s32.totalorder %s33, 1
      %p91 = por %p89, %p90
      %p93 = scmp.ne.s32.totalorder %s78, %s92
      %p94 = scmp.eq.s32.totalorder %s33, 0
      %p95 = por %p93, %p94
      %s97 = sadd.s32 %s96, 1
      %p100 = scmp.eq.s32.totalorder %s27, 1
      %p101 = scmp.ne.s32.totalorder %s96, %s98
      %p102 = scmp.eq.s32.totalorder %s27, 0
      %p103 = por %p101, %p102
      %p104 = scmp.ne.s32.totalorder %s96, %s98
      %p105 = scmp.eq.s32.totalorder %s32, 1
      %p106 = por %p104, %p105
      %p107 = scmp.ne.s32.totalorder %s98, %s99
      %p108 = scmp.eq.s32.totalorder %s32, 0
      %p109 = por %p107, %p108
      %p110 = scmp.ne.s32.totalorder %s98, %s99
      %p111 = scmp.eq.s32.totalorder %s33, 1
      %p112 = por %p110, %p111
      %p114 = scmp.ne.s32.totalorder %s99, %s113
      %p115 = scmp.eq.s32.totalorder %s33, 0
      %p116 = por %p114, %p115
      %s118 = sadd.s32 %s117, 1
      %p121 = scmp.eq.s32.totalorder %s27, 1
      %p122 = scmp.ne.s32.totalorder %s117, %s119
      %p123 = scmp.eq.s32.totalorder %s27, 0
      %p124 = por %p122, %p123
      %p125 = scmp.ne.s32.totalorder %s117, %s119
      %p126 = scmp.eq.s32.totalorder %s32, 1
      %p127 = por %p125, %p126
      %p128 = scmp.ne.s32.totalorder %s119, %s120
      %p129 = scmp.eq.s32.totalorder %s32, 0
      %p130 = por %p128, %p129
      %p131 = scmp.ne.s32.totalorder %s119, %s120
      %p132 = scmp.eq.s32.totalorder %s33, 1
      %p133 = por %p131, %p132
      %p135 = scmp.ne.s32.totalorder %s120, %s134
      %p136 = scmp.eq.s32.totalorder %s33, 0
      %p137 = por %p135, %p136
      %s139 = sadd.s32 %s138, 1
      %p142 = scmp.eq.s32.totalorder %s27, 1
      %p143 = scmp.ne.s32.totalorder %s138, %s140
      %p144 = scmp.eq.s32.totalorder %s27, 0
      %p145 = por %p143, %p144
      %p146 = scmp.ne.s32.totalorder %s138, %s140
      %p147 = scmp.eq.s32.totalorder %s32, 1
      %p148 = por %p146, %p147
      %p149 = scmp.ne.s32.totalorder %s140, %s141
      %p150 = scmp.eq.s32.totalorder %s32, 0
      %p151 = por %p149, %p150
      %p152 = scmp.ne.s32.totalorder %s140, %s141
      %p153 = scmp.eq.s32.totalorder %s33, 1
      %p154 = por %p152, %p153
      %p156 = scmp.ne.s32.totalorder %s141, %s155
      %p157 = scmp.eq.s32.totalorder %s33, 0
      %p158 = por %p156, %p157
      %s160 = sadd.s32 %s159, 1
      %p163 = scmp.eq.s32.totalorder %s27, 1
      %p164 = scmp.ne.s32.totalorder %s159, %s161
      %p165 = scmp.eq.s32.totalorder %s27, 0
      %p166 = por %p164, %p165
      %p167 = scmp.ne.s32.totalorder %s159, %s161
      %p168 = scmp.eq.s32.totalorder %s32, 1
      %p169 = por %p167, %p168
      %p170 = scmp.ne.s32.totalorder %s161, %s162
      %p171 = scmp.eq.s32.totalorder %s32, 0
      %p172 = por %p170, %p171
      %p173 = scmp.ne.s32.totalorder %s161, %s162
      %p174 = scmp.eq.s32.totalorder %s33, 1
      %p175 = por %p173, %p174
      %p177 = scmp.ne.s32.totalorder %s162, %s176
      %p178 = scmp.eq.s32.totalorder %s33, 0
      %p179 = por %p177, %p178
      %s181 = sadd.s32 %s180, 1
      %p184 = scmp.eq.s32.totalorder %s27, 1
      %p185 = scmp.ne.s32.totalorder %s180, %s182
      %p186 = scmp.eq.s32.totalorder %s27, 0
      %p187 = por %p185, %p186
      %p188 = scmp.ne.s32.totalorder %s180, %s182
      %p189 = scmp.eq.s32.totalorder %s32, 1
      %p190 = por %p188, %p189
      %p191 = scmp.ne.s32.totalorder %s182, %s183
      %p192 = scmp.eq.s32.totalorder %s32, 0
      %p193 = por %p191, %p192
      %p194 = scmp.ne.s32.totalorder %s182, %s183
      %p195 = scmp.eq.s32.totalorder %s33, 1
      %p196 = por %p194, %p195
      %p198 = scmp.ne.s32.totalorder %s183, %s197
      %p199 = scmp.eq.s32.totalorder %s33, 0
      %p200 = por %p198, %p199
      %s202 = sadd.s32 %s201, 1
      %p205 = scmp.eq.s32.totalorder %s27, 1
      %p206 = scmp.ne.s32.totalorder %s201, %s203
      %p207 = scmp.eq.s32.totalorder %s27, 0
      %p208 = por %p206, %p207
      %p209 = scmp.ne.s32.totalorder %s201, %s203
      %p210 = scmp.eq.s32.totalorder %s32, 1
      %p211 = por %p209, %p210
      %p212 = scmp.ne.s32.totalorder %s203, %s204
      %p213 = scmp.eq.s32.totalorder %s32, 0
      %p214 = por %p212, %p213
      %p215 = scmp.ne.s32.totalorder %s203, %s204
      %p216 = scmp.eq.s32.totalorder %s33, 1
      %p217 = por %p215, %p216
      %p219 = scmp.ne.s32.totalorder %s204, %s218
      %p220 = scmp.eq.s32.totalorder %s33, 0
      %p221 = por %p219, %p220
      %s223 = sadd.s32 %s222, 1
      %p226 = scmp.eq.s32.totalorder %s27, 1
      %p227 = scmp.ne.s32.totalorder %s222, %s224
      %p228 = scmp.eq.s32.totalorder %s27, 0
      %p229 = por %p227, %p228
      %p230 = scmp.ne.s32.totalorder %s222, %s224
      %p231 = scmp.eq.s32.totalorder %s32, 1
      %p232 = por %p230, %p231
      %p233 = scmp.ne.s32.totalorder %s224, %s225
      %p234 = scmp.eq.s32.totalorder %s32, 0
      %p235 = por %p233, %p234
      %p236 = scmp.ne.s32.totalorder %s224, %s225
      %p237 = scmp.eq.s32.totalorder %s33, 1
      %p238 = por %p236, %p237
      %p240 = scmp.ne.s32.totalorder %s225, %s239
      %p241 = scmp.eq.s32.totalorder %s33, 0
      %p242 = por %p240, %p241
      %s244 = sadd.s32 %s243, 1
      %p247 = scmp.eq.s32.totalorder %s27, 1
      %p248 = scmp.ne.s32.totalorder %s243, %s245
      %p249 = scmp.eq.s32.totalorder %s27, 0
      %p250 = por %p248, %p249
      %p251 = scmp.ne.s32.totalorder %s243, %s245
      %p252 = scmp.eq.s32.totalorder %s32, 1
      %p253 = por %p251, %p252
      %p254 = scmp.ne.s32.totalorder %s245, %s246
      %p255 = scmp.eq.s32.totalorder %s32, 0
      %p256 = por %p254, %p255
      %p257 = scmp.ne.s32.totalorder %s245, %s246
      %p258 = scmp.eq.s32.totalorder %s33, 1
      %p259 = por %p257, %p258
      %p261 = scmp.ne.s32.totalorder %s246, %s260
      %p262 = scmp.eq.s32.totalorder %s33, 0
      %p263 = por %p261, %p262
      %s264 = ssub.s32 %s34, %s46
      %s265 = ssub.s32 %s35, %s42
      %s266 = sor.u32 %s264, %s265
      %p267 = scmp.eq.s32.totalorder %s266, 0
      %s269 = sadd.s32 %s268, 1
      %s270 = scalar_select %p267, %s268, %s269
      %p273 = pneg %p267
      %p274 = scmp.eq.s32.totalorder %s27, 1
      %p275 = por %p273, %p274
      %p276 = scmp.ne.s32.totalorder %s268, %s271
      %p277 = scmp.eq.s32.totalorder %s27, 0
      %p278 = por %p276, %p277
      %p279 = scmp.ne.s32.totalorder %s268, %s271
      %p280 = scmp.eq.s32.totalorder %s32, 1
      %p281 = por %p279, %p280
      %p282 = scmp.ne.s32.totalorder %s271, %s272
      %p283 = scmp.eq.s32.totalorder %s32, 0
      %p284 = por %p282, %p283
      %p285 = scmp.ne.s32.totalorder %s271, %s272
      %p286 = scmp.eq.s32.totalorder %s33, 1
      %p287 = por %p285, %p286
      %p289 = scmp.ne.s32.totalorder %s272, %s288
      %p290 = scmp.eq.s32.totalorder %s33, 0
      %p291 = por %p289, %p290
      %s292 = ssub.s32 %s34, %s46
      %s293 = ssub.s32 %s35, %s42
      %s294 = sor.u32 %s292, %s293
      %p295 = scmp.eq.s32.totalorder %s294, 0
      %s297 = sadd.s32 %s296, 1
      %s298 = scalar_select %p295, %s296, %s297
      %p301 = pneg %p295
      %p302 = scmp.eq.s32.totalorder %s27, 1
      %p303 = por %p301, %p302
      %p304 = scmp.ne.s32.totalorder %s296, %s299
      %p305 = scmp.eq.s32.totalorder %s27, 0
      %p306 = por %p304, %p305
      %p307 = scmp.ne.s32.totalorder %s296, %s299
      %p308 = scmp.eq.s32.totalorder %s32, 1
      %p309 = por %p307, %p308
      %p310 = scmp.ne.s32.totalorder %s299, %s300
      %p311 = scmp.eq.s32.totalorder %s32, 0
      %p312 = por %p310, %p311
      %p313 = scmp.ne.s32.totalorder %s299, %s300
      %p314 = scmp.eq.s32.totalorder %s33, 1
      %p315 = por %p313, %p314
      %p317 = scmp.ne.s32.totalorder %s300, %s316
      %p318 = scmp.eq.s32.totalorder %s33, 0
      %p319 = por %p317, %p318
      %s320 = ssub.s32 %s34, %s46
      %p321 = scmp.eq.s32.totalorder %s320, 0
      %s323 = sadd.s32 %s322, 1
      %s324 = scalar_select %p321, %s322, %s323
      %p327 = pneg %p321
      %p328 = scmp.eq.s32.totalorder %s27, 1
      %p329 = por %p327, %p328
      %p330 = scmp.ne.s32.totalorder %s322, %s325
      %p331 = scmp.eq.s32.totalorder %s27, 0
      %p332 = por %p330, %p331
      %p333 = scmp.ne.s32.totalorder %s322, %s325
      %p334 = scmp.eq.s32.totalorder %s32, 1
      %p335 = por %p333, %p334
      %p336 = scmp.ne.s32.totalorder %s325, %s326
      %p337 = scmp.eq.s32.totalorder %s32, 0
      %p338 = por %p336, %p337
      %p339 = scmp.ne.s32.totalorder %s325, %s326
      %p340 = scmp.eq.s32.totalorder %s33, 1
      %p341 = por %p339, %p340
      %p343 = scmp.ne.s32.totalorder %s326, %s342
      %p344 = scmp.eq.s32.totalorder %s33, 0
      %p345 = por %p343, %p344
      %s346 = ssub.s32 %s34, %s46
      %p347 = scmp.eq.s32.totalorder %s346, 0
      %s349 = sadd.s32 %s348, 1
      %s350 = scalar_select %p347, %s348, %s349
      %p353 = pneg %p347
      %p354 = scmp.eq.s32.totalorder %s27, 1
      %p355 = por %p353, %p354
      %p356 = scmp.ne.s32.totalorder %s348, %s351
      %p357 = scmp.eq.s32.totalorder %s27, 0
      %p358 = por %p356, %p357
      %p359 = scmp.ne.s32.totalorder %s348, %s351
      %p360 = scmp.eq.s32.totalorder %s32, 1
      %p361 = por %p359, %p360
      %p362 = scmp.ne.s32.totalorder %s351, %s352
      %p363 = scmp.eq.s32.totalorder %s32, 0
      %p364 = por %p362, %p363
      %p365 = scmp.ne.s32.totalorder %s351, %s352
      %p366 = scmp.eq.s32.totalorder %s33, 1
      %p367 = por %p365, %p366
      %p369 = scmp.ne.s32.totalorder %s352, %s368
      %p370 = scmp.eq.s32.totalorder %s33, 0
      %p371 = por %p369, %p370
      %s372 = ssub.s32 %s34, %s46
      %p373 = scmp.eq.s32.totalorder %s372, 0
      %s375 = sadd.s32 %s374, 1
      %s376 = scalar_select %p373, %s374, %s375
      %p379 = pneg %p373
      %p380 = scmp.eq.s32.totalorder %s27, 1
      %p381 = por %p379, %p380
      %p382 = scmp.ne.s32.totalorder %s374, %s377
      %p383 = scmp.eq.s32.totalorder %s27, 0
      %p384 = por %p382, %p383
      %p385 = scmp.ne.s32.totalorder %s374, %s377
      %p386 = scmp.eq.s32.totalorder %s32, 1
      %p387 = por %p385, %p386
      %p388 = scmp.ne.s32.totalorder %s377, %s378
      %p389 = scmp.eq.s32.totalorder %s32, 0
      %p390 = por %p388, %p389
      %p391 = scmp.ne.s32.totalorder %s377, %s378
      %p392 = scmp.eq.s32.totalorder %s33, 1
      %p393 = por %p391, %p392
      %p395 = scmp.ne.s32.totalorder %s378, %s394
      %p396 = scmp.eq.s32.totalorder %s33, 0
      %p397 = por %p395, %p396
      %p398 = scmp.le.s32.totalorder 1, %s27
      %p399 = scmp.lt.s32.totalorder %s27, 3
      %p400 = pnand %p398, %p399
      %p401 = pneg %p400
      // Predicated region
      $region9: #{tpu_custom_call.1} parent=5 // pred_check
        _
      $region10: #{tpu_custom_call.1} parent=5 // pred_check_branch
        %403 = sbr.rel (%p400) target = $region12
      $region11: #{tpu_custom_call.1} parent=5 // pred_region
        %s404 = ssub.s32 %s27, 1
        // Predicated region
        $region13: #{tpu_custom_call.1} parent=11 // pred_check
          %p405 = pneg %p88
        $region14: #{tpu_custom_call.1} parent=11 // pred_check_branch
          %407 = sbr.rel (%p405) target = $region16
        $region15: #{tpu_custom_call.1} parent=11 // pred_region
          _
        $region16: #{tpu_custom_call.1} parent=11 // pred_fallthru
          _
        // Predicated region
        $region17: #{tpu_custom_call.1} parent=11 // pred_check
          %p408 = pneg %p109
        $region18: #{tpu_custom_call.1} parent=11 // pred_check_branch
          %410 = sbr.rel (%p408) target = $region20
        $region19: #{tpu_custom_call.1} parent=11 // pred_region
          _
        $region20: #{tpu_custom_call.1} parent=11 // pred_fallthru
          _
        // Predicated region
        $region21: #{tpu_custom_call.1} parent=11 // pred_check
          %p411 = pneg %p130
        $region22: #{tpu_custom_call.1} parent=11 // pred_check_branch
          %413 = sbr.rel (%p411) target = $region24
        $region23: #{tpu_custom_call.1} parent=11 // pred_region
          _
        $region24: #{tpu_custom_call.1} parent=11 // pred_fallthru
          _
        // Predicated region
        $region25: #{tpu_custom_call.1} parent=11 // pred_check
          %p414 = pneg %p151
        $region26: #{tpu_custom_call.1} parent=11 // pred_check_branch
          %416 = sbr.rel (%p414) target = $region28
        $region27: #{tpu_custom_call.1} parent=11 // pred_region
          _
        $region28: #{tpu_custom_call.1} parent=11 // pred_fallthru
          _
        // Predicated region
        $region29: #{tpu_custom_call.1} parent=11 // pred_check
          %p417 = pneg %p172
        $region30: #{tpu_custom_call.1} parent=11 // pred_check_branch
          %419 = sbr.rel (%p417) target = $region32
        $region31: #{tpu_custom_call.1} parent=11 // pred_region
          _
        $region32: #{tpu_custom_call.1} parent=11 // pred_fallthru
          _
        // Predicated region
        $region33: #{tpu_custom_call.1} parent=11 // pred_check
          %p420 = pneg %p193
        $region34: #{tpu_custom_call.1} parent=11 // pred_check_branch
          %422 = sbr.rel (%p420) target = $region36
        $region35: #{tpu_custom_call.1} parent=11 // pred_region
          _
        $region36: #{tpu_custom_call.1} parent=11 // pred_fallthru
          _
        // Predicated region
        $region37: #{tpu_custom_call.1} parent=11 // pred_check
          %p423 = pneg %p214
        $region38: #{tpu_custom_call.1} parent=11 // pred_check_branch
          %425 = sbr.rel (%p423) target = $region40
        $region39: #{tpu_custom_call.1} parent=11 // pred_region
          _
        $region40: #{tpu_custom_call.1} parent=11 // pred_fallthru
          _
        // Predicated region
        $region41: #{tpu_custom_call.1} parent=11 // pred_check
          %p426 = pneg %p235
        $region42: #{tpu_custom_call.1} parent=11 // pred_check_branch
          %428 = sbr.rel (%p426) target = $region44
        $region43: #{tpu_custom_call.1} parent=11 // pred_region
          _
        $region44: #{tpu_custom_call.1} parent=11 // pred_fallthru
          _
        // Predicated region
        $region45: #{tpu_custom_call.1} parent=11 // pred_check
          %p429 = pneg %p256
        $region46: #{tpu_custom_call.1} parent=11 // pred_check_branch
          %431 = sbr.rel (%p429) target = $region48
        $region47: #{tpu_custom_call.1} parent=11 // pred_region
          _
        $region48: #{tpu_custom_call.1} parent=11 // pred_fallthru
          _
      $region12: #{tpu_custom_call.1} parent=5 // pred_fallthru
        _
      %p432 = scmp.lt.s32.totalorder %s27, 2
      // Predicated region
      $region49: #{tpu_custom_call.1} parent=5 // pred_check
        %p433 = pneg %p432
      $region50: #{tpu_custom_call.1} parent=5 // pred_check_branch
        %435 = sbr.rel (%p433) target = $region52
      $region51: #{tpu_custom_call.1} parent=5 // pred_region
        // Predicated region
        $region53: #{tpu_custom_call.1} parent=51 // pred_check
          %p436 = pneg %p61
        $region54: #{tpu_custom_call.1} parent=51 // pred_check_branch
          %438 = sbr.rel (%p436) target = $region56
        $region55: #{tpu_custom_call.1} parent=51 // pred_region
          %s439 = smul.u32 2, %s35
          %p440 = scmp.lt.s32.totalorder %s34, 1
          %s441 = scalar_select %p440, %s34, 1
          %p442 = scmp.lt.s32.totalorder %s439, 1
          %s443 = scalar_select %p442, %s439, 1
          %s444 = smul.addr %s441, 8
          %s445 = sadd.s32 %s443, %s444
          %s446 = smul.addr %s445, 8
          %s447 = scalar_lea.vmem %s0, %s446
          %s448 = smul.u32 2, %s35
        $region56: #{tpu_custom_call.1} parent=51 // pred_fallthru
          _
      $region52: #{tpu_custom_call.1} parent=5 // pred_fallthru
        _
      %p449 = scmp.le.s32.totalorder 1, %s27
      %p450 = scmp.lt.s32.totalorder %s27, 3
      %p451 = pnand %p449, %p450
      %p452 = pneg %p451
      // Predicated region
      $region57: #{tpu_custom_call.1} parent=5 // pred_check
        _
      $region58: #{tpu_custom_call.1} parent=5 // pred_check_branch
        %454 = sbr.rel (%p451) target = $region60
      $region59: #{tpu_custom_call.1} parent=5 // pred_region
        %s455 = ssub.s32 %s27, 1
        %s456 = smul.u32 2, %s37
        %p457 = scmp.lt.s32.totalorder %s36, 1
        %s458 = scalar_select %p457, %s36, 1
        %p459 = scmp.lt.s32.totalorder %s456, 1
        %s460 = scalar_select %p459, %s456, 1
        %s461 = smul.addr %s458, 8
        %s462 = sadd.s32 %s460, %s461
        %s463 = smul.addr %s462, 8
        %s464 = scalar_lea.vmem %s0, %s463
        %p465 = pneg %p67
        %p466 = pneg %p64
        %p467 = pneg %p88
        %p468 = pneg %p85
        %p469 = pneg %p109
        %p470 = pneg %p106
        %p471 = pneg %p130
        %p472 = pneg %p127
        %p473 = pneg %p151
        %p474 = pneg %p148
        %p475 = pneg %p172
        %p476 = pneg %p169
        %p477 = pneg %p193
        %p478 = pneg %p190
        %p479 = pneg %p214
        %p480 = pneg %p211
        %p481 = pneg %p235
        %p482 = pneg %p232
        %p483 = pneg %p256
        %p484 = pneg %p253
        %p485 = pneg %p284
        %p486 = pneg %p281
        %s487 = sand.u32 %s271, 1
        %s488 = scalar_lea.sflag [#allocation6], %s487
        %s489 = sand.u32 %s271, 1
        %s490 = smul.addr %s489, 64
        %s491 = scalar_lea.vmem [#allocation5], %s490
        %p492 = pneg %p312
        %p493 = pneg %p309
        %s494 = sand.u32 %s32, 1
        %s495 = scalar_lea.sflag [#allocation8], %s494
        %s496 = sand.u32 %s299, 1
        %s497 = smul.addr %s496, 2
        %s498 = scalar_lea.vmem [#allocation7], %s497
        %p499 = pneg %p338
        %p500 = pneg %p335
        %p501 = scmp.lt.s32.totalorder %s36, 1
        %s502 = scalar_select %p501, %s36, 1
        %s503 = scalar_lea.vmem %s12, %s502
        %p504 = pneg %p364
        %p505 = pneg %p361
        %p506 = scmp.lt.s32.totalorder %s36, 1
        %s507 = scalar_select %p506, %s36, 1
        %s508 = scalar_lea.vmem %s13, %s507
        %p509 = pneg %p390
        %p510 = pneg %p387
        %s511 = sand.u32 %s32, 1
        %s512 = scalar_lea.sflag [#allocation8], %s511
        %s513 = sand.u32 %s377, 1
        %s514 = smul.addr %s513, 16
        %s515 = scalar_lea.vmem [#allocation9], %s514
        %s516 = smul.u32 2, %s37
        %p517 = scmp.lt.s32.totalorder %s36, 1
        %s518 = scalar_select %p517, %s36, 1
        %p519 = scmp.lt.s32.totalorder %s516, 1
        %s520 = scalar_select %p519, %s516, 1
        %s521 = smul.addr %s518, 8
        %s522 = sadd.s32 %s520, %s521
        %s523 = smul.addr %s522, 8
        %s524 = scalar_lea.vmem %s0, %s523
        %s525 = smul.u32 2, %s37
        %s526 = smul.u32 2, %s37
        %s527 = smul.u32 2, %s37
        %p528 = scmp.lt.s32.totalorder %s36, 1
        %s529 = scalar_select %p528, %s36, 1
        %s530 = scalar_lea.vmem %s12, %s529
        %p531 = scmp.lt.s32.totalorder %s36, 1
        %s532 = scalar_select %p531, %s36, 1
        %s533 = scalar_lea.vmem %s13, %s532
        %p534 = scmp.eq.s32.totalorder %s37, 0
        // Predicated region
        $region61: #{tpu_custom_call.1} parent=59 // pred_check
          %p535 = pneg %p534
        $region62: #{tpu_custom_call.1} parent=59 // pred_check_branch
          %537 = sbr.rel (%p535) target = $region64
        $region63: #{tpu_custom_call.1} parent=59 // pred_region
          %538 = vst [vmem:[#allocation2] sm:$0xff] 0.0
          %539 = vst [vmem:[#allocation2 + $0x8] sm:$0xff] 0.0
          %540 = vst [vmem:[#allocation3] sm:$0xff] 0.0
          %541 = vst [vmem:[#allocation3 + $0x8] sm:$0xff] 0.0
          %vm542 = vcmask 130048
          %543 = vst.msk [vmem:[#allocation4] sm:$0xff] %vm542, 0.0
          %544 = vst.msk [vmem:[#allocation4 + $0x8] sm:$0xff] %vm542, 0.0
        $region64: #{tpu_custom_call.1} parent=59 // pred_fallthru
          _
        %v545 = vld [vmem:[%s524] sm:$0xff]
        %v546 = vld [vmem:[%s524 + $0x8] sm:$0xff]
        %v547 = vld [vmem:[%s524 + $0x10] sm:$0xff]
        %v548 = vld [vmem:[%s524 + $0x18] sm:$0xff]
        %v549 = vld [vmem:[%s524 + $0x20] sm:$0xff]
        %v550 = vld [vmem:[%s524 + $0x28] sm:$0xff]
        %v551 = vld [vmem:[%s524 + $0x30] sm:$0xff]
        %v552 = vld [vmem:[%s524 + $0x38] sm:$0xff]
        %v553 = vld [vmem:[%s1] sm:$0xff]
        %v554 = vld [vmem:[%s2] sm:$0xff]
        %556 = vset.pattern.permute.xlu0 0
        %557 = vperm.xlu0 %556, %v554
        %v558 = vpop.permute.xlu0 %557
        %vm560 = vcmask 261120
        %v562 = vsel %vm560, %v553, 0
        %564 = vmatprep.subr.mxu0 0.0
        %565 = vmatpush1.msra.mxu0 0.0
        %566 = vmatprep.subr.mxu0 0.0
        %567 = vmatpush1.msra.mxu0 0.0
        %568 = vmatprep.subr.mxu0 0.0
        %569 = vmatpush1.msra.mxu0 0.0
        %570 = vmatprep.subr.mxu0 0.0
        %571 = vmatpush1.msra.mxu0 0.0
        %572 = vmatprep.subr.mxu0 0.0
        %573 = vmatpush1.msra.mxu0 0.0
        %574 = vmatprep.subr.mxu0 0.0
        %575 = vmatpush1.msra.mxu0 0.0
        %576 = vmatprep.subr.mxu0 0.0
        %577 = vmatpush1.msra.mxu0 0.0
        %578 = vmatprep.subr.mxu0 0.0
        %579 = vmatpush1.msra.mxu0 0.0
        %580 = vmatprep.subr.mxu0 0.0
        %581 = vmatpush1.msra.mxu0 0.0
        %582 = vmatprep.subr.mxu0 0.0
        %583 = vmatpush1.msra.mxu0 0.0
        %584 = vmatprep.subr.mxu0 0.0
        %585 = vmatpush1.msra.mxu0 0.0
        %586 = vmatprep.subr.mxu0 0.0
        %587 = vmatpush1.msra.mxu0 0.0
        %588 = vmatprep.subr.mxu0 %v552
        %589 = vmatpush1.msra.mxu0 %v551
        %590 = vmatprep.subr.mxu0 %v550
        %591 = vmatpush1.msra.mxu0 %v549
        %592 = vmatprep.subr.mxu0 %v548
        %593 = vmatpush1.msra.mxu0 %v547
        %594 = vmatprep.subr.mxu0 %v546
        %595 = vmatpush1.msra.mxu0 %v545
        %596 = vmatprep.subr.mxu0 0.0
        %597 = vmatpush2.msra.mxu0 0.0
        %598 = vmatprep.subr.mxu0 0.0
        %599 = vmatpush2.msra.mxu0 0.0
        %600 = vmatprep.subr.mxu0 0.0
        %601 = vmatpush2.msra.mxu0 0.0
        %602 = vmatprep.subr.mxu0 0.0
        %603 = vmatpush2.msra.mxu0 0.0
        %604 = vmatprep.subr.mxu0 0.0
        %605 = vmatpush2.msra.mxu0 0.0
        %606 = vmatprep.subr.mxu0 0.0
        %607 = vmatpush2.msra.mxu0 0.0
        %608 = vmatprep.subr.mxu0 0.0
        %609 = vmatpush2.msra.mxu0 0.0
        %610 = vmatprep.subr.mxu0 0.0
        %611 = vmatpush2.msra.mxu0 0.0
        %612 = vmatprep.subr.mxu0 0.0
        %613 = vmatpush2.msra.mxu0 0.0
        %614 = vmatprep.subr.mxu0 0.0
        %615 = vmatpush2.msra.mxu0 0.0
        %616 = vmatprep.subr.mxu0 0.0
        %617 = vmatpush2.msra.mxu0 0.0
        %618 = vmatprep.subr.mxu0 0.0
        %619 = vmatpush2.msra.mxu0 0.0
        %620 = vmatprep.subr.mxu0 0.0
        %621 = vmatpush2.msra.mxu0 0.0
        %622 = vmatprep.subr.mxu0 0.0
        %623 = vmatpush2.msra.mxu0 0.0
        %624 = vmatprep.subr.mxu0 0.0
        %625 = vmatpush2.msra.mxu0 0.0
        %626 = vmatprep.subr.mxu0 0.0
        %627 = vmatpush2.msra.mxu0 0.0
        %628 = vmatprep.mubr.f32.mxu0 0.0
        %629 = vmatmul.mubr.f32.gmra.mxu0 %v562
        %v630 = vpop.f32.mrf.mxu0
        %v631 = vadd.f32 %v558, %v630
        %v632 = vpop.f32.mrf.mxu0
        %v633 = vadd.f32 %v558, %v632
        %634 = vdwg.mxu0
        %vm635 = vcmp.gt.f32.partialorder %v631, 0.0
        %vm636 = vcmp.gt.f32.partialorder %v633, 0.0
        %v637 = vsel %vm635, 1, 0
        %v638 = vsel %vm636, 1, 0
        %v639 = vcvt.s32.f32 %v637
        %v640 = vcvt.s32.f32 %v638
        %v641 = vmul.f32 %v639, 2.0
        %v642 = vmul.f32 %v640, 2.0
        %v643 = vsub.f32 %v641, 1.0
        %v644 = vsub.f32 %v642, 1.0
        %v645 = vld [vmem:[%s5] sm:$0x1]
        %vm646 = vcmask 64512
        %v648 = vsel %vm646, %v645, 0
        %650 = vmatprep.subr.mxu0 0.0
        %651 = vmatpush1.msra.mxu0 0.0
        %652 = vmatprep.subr.mxu0 0.0
        %653 = vmatpush1.msra.mxu0 0.0
        %654 = vmatprep.subr.mxu0 0.0
        %655 = vmatpush1.msra.mxu0 0.0
        %656 = vmatprep.subr.mxu0 0.0
        %657 = vmatpush1.msra.mxu0 0.0
        %658 = vmatprep.subr.mxu0 0.0
        %659 = vmatpush1.msra.mxu0 0.0
        %660 = vmatprep.subr.mxu0 0.0
        %661 = vmatpush1.msra.mxu0 0.0
        %662 = vmatprep.subr.mxu0 0.0
        %663 = vmatpush1.msra.mxu0 0.0
        %664 = vmatprep.subr.mxu0 0.0
        %665 = vmatpush1.msra.mxu0 0.0
        %666 = vmatprep.subr.mxu0 0.0
        %667 = vmatpush1.msra.mxu0 0.0
        %668 = vmatprep.subr.mxu0 0.0
        %669 = vmatpush1.msra.mxu0 0.0
        %670 = vmatprep.subr.mxu0 0.0
        %671 = vmatpush1.msra.mxu0 0.0
        %672 = vmatprep.subr.mxu0 0.0
        %673 = vmatpush1.msra.mxu0 0.0
        %674 = vmatprep.subr.mxu0 0.0
        %675 = vmatpush1.msra.mxu0 0.0
        %676 = vmatprep.subr.mxu0 0.0
        %677 = vmatpush1.msra.mxu0 0.0
        %678 = vmatprep.subr.mxu0 0.0
        %679 = vmatpush1.msra.mxu0 0.0
        %680 = vmatprep.subr.mxu0 %v640
        %681 = vmatpush1.msra.mxu0 %v639
        %682 = vmatprep.subr.mxu0 0.0
        %683 = vmatpush2.msra.mxu0 0.0
        %684 = vmatprep.subr.mxu0 0.0
        %685 = vmatpush2.msra.mxu0 0.0
        %686 = vmatprep.subr.mxu0 0.0
        %687 = vmatpush2.msra.mxu0 0.0
        %688 = vmatprep.subr.mxu0 0.0
        %689 = vmatpush2.msra.mxu0 0.0
        %690 = vmatprep.subr.mxu0 0.0
        %691 = vmatpush2.msra.mxu0 0.0
        %692 = vmatprep.subr.mxu0 0.0
        %693 = vmatpush2.msra.mxu0 0.0
        %694 = vmatprep.subr.mxu0 0.0
        %695 = vmatpush2.msra.mxu0 0.0
        %696 = vmatprep.subr.mxu0 0.0
        %697 = vmatpush2.msra.mxu0 0.0
        %698 = vmatprep.subr.mxu0 0.0
        %699 = vmatpush2.msra.mxu0 0.0
        %700 = vmatprep.subr.mxu0 0.0
        %701 = vmatpush2.msra.mxu0 0.0
        %702 = vmatprep.subr.mxu0 0.0
        %703 = vmatpush2.msra.mxu0 0.0
        %704 = vmatprep.subr.mxu0 0.0
        %705 = vmatpush2.msra.mxu0 0.0
        %706 = vmatprep.subr.mxu0 0.0
        %707 = vmatpush2.msra.mxu0 0.0
        %708 = vmatprep.subr.mxu0 0.0
        %709 = vmatpush2.msra.mxu0 0.0
        %710 = vmatprep.subr.mxu0 0.0
        %711 = vmatpush2.msra.mxu0 0.0
        %712 = vmatprep.subr.mxu0 0.0
        %713 = vmatpush2.msra.mxu0 0.0
        %714 = vmatprep.mubr.f32.mxu0 0.0
        %715 = vmatmul.mubr.f32.gmra.mxu0 %v648
        %v716 = vpop.f32.mrf.mxu0
        %v717 = vadd.f32 0.5, %v716
        %v718 = vpop.f32.mrf.mxu0
        %v719 = vadd.f32 0.5, %v718
        %720 = vdwg.mxu0
        %v721 = vcvt.f32.s32.to.zero.pseudo %v717
        %v722 = vcvt.f32.s32.to.zero.pseudo %v719
        %v723 = vcombine.low %v721, %v722
        %v725 = vunpack.c.l.s4 1966171168
        %v726 = vunpack.c.0.s8 %v725
        %v727 = vlaneseq
        %v728 = vshrl.u32 %v727, 7
        %v729 = vsub.s32 %v726, %v728
        %v730 = vrot.slane %v723, %v729
        %v732 = vunpack.c.l.s4 1966171168
        %v733 = vunpack.c.0.s8 %v732
        %v734 = vlaneseq
        %v735 = vshrl.u32 %v734, 7
        %v736 = vsub.s32 %v733, %v735
        %v737 = vrot.slane %v730, %v736
        %v738 = vlaneseq
        %vm739 = vcmp.ge.s32.totalorder %v738, 0
        %vm740 = vcmp.lt.s32.totalorder %v738, 256
        %vm741 = vmand %vm739, %vm740
        %742 = vst.msk [vmem:[%s498] sm:$0x3] %vm741, %v737
        %v743 = vld [vmem:[%s3] sm:$0xff]
        %v744 = vld [vmem:[%s3 + $0x8] sm:$0xff]
        %v745 = vld [vmem:[%s3 + $0x10] sm:$0xff]
        %v746 = vld [vmem:[%s3 + $0x18] sm:$0xff]
        %v747 = vld [vmem:[%s4] sm:$0xff]
        %v748 = vld [vmem:[%s4 + $0x8] sm:$0xff]
        %v749 = vld [vmem:[%s4 + $0x10] sm:$0xff]
        %v750 = vld [vmem:[%s4 + $0x18] sm:$0xff]
        %752 = vset.pattern.permute.xlu0 0
        %753 = vperm.xlu0 %752, %v747
        %v754 = vpop.permute.xlu0 %753
        %757 = vset.pattern.permute.xlu0 0
        %758 = vperm.xlu0 %757, %v748
        %v759 = vpop.permute.xlu0 %758
        %762 = vset.pattern.permute.xlu0 0
        %763 = vperm.xlu0 %762, %v749
        %v764 = vpop.permute.xlu0 %763
        %767 = vset.pattern.permute.xlu0 0
        %768 = vperm.xlu0 %767, %v750
        %v769 = vpop.permute.xlu0 %768
        %v772 = vsel %vm646, %v743, 0
        %v775 = vsel %vm646, %v744, 0
        %v778 = vsel %vm646, %v745, 0
        %v781 = vsel %vm646, %v746, 0
        %783 = vmatprep.subr.mxu0 0.0
        %784 = vmatpush1.msra.mxu0 0.0
        %785 = vmatprep.subr.mxu0 0.0
        %786 = vmatpush1.msra.mxu0 0.0
        %787 = vmatprep.subr.mxu0 0.0
        %788 = vmatpush1.msra.mxu0 0.0
        %789 = vmatprep.subr.mxu0 0.0
        %790 = vmatpush1.msra.mxu0 0.0
        %791 = vmatprep.subr.mxu0 0.0
        %792 = vmatpush1.msra.mxu0 0.0
        %793 = vmatprep.subr.mxu0 0.0
        %794 = vmatpush1.msra.mxu0 0.0
        %795 = vmatprep.subr.mxu0 0.0
        %796 = vmatpush1.msra.mxu0 0.0
        %797 = vmatprep.subr.mxu0 0.0
        %798 = vmatpush1.msra.mxu0 0.0
        %799 = vmatprep.subr.mxu0 0.0
        %800 = vmatpush1.msra.mxu0 0.0
        %801 = vmatprep.subr.mxu0 0.0
        %802 = vmatpush1.msra.mxu0 0.0
        %803 = vmatprep.subr.mxu0 0.0
        %804 = vmatpush1.msra.mxu0 0.0
        %805 = vmatprep.subr.mxu0 0.0
        %806 = vmatpush1.msra.mxu0 0.0
        %807 = vmatprep.subr.mxu0 0.0
        %808 = vmatpush1.msra.mxu0 0.0
        %809 = vmatprep.subr.mxu0 0.0
        %810 = vmatpush1.msra.mxu0 0.0
        %811 = vmatprep.subr.mxu0 0.0
        %812 = vmatpush1.msra.mxu0 0.0
        %813 = vmatprep.subr.mxu0 %v644
        %814 = vmatpush1.msra.mxu0 %v643
        %815 = vmatprep.subr.mxu0 0.0
        %816 = vmatpush2.msra.mxu0 0.0
        %817 = vmatprep.subr.mxu0 0.0
        %818 = vmatpush2.msra.mxu0 0.0
        %819 = vmatprep.subr.mxu0 0.0
        %820 = vmatpush2.msra.mxu0 0.0
        %821 = vmatprep.subr.mxu0 0.0
        %822 = vmatpush2.msra.mxu0 0.0
        %823 = vmatprep.subr.mxu0 0.0
        %824 = vmatpush2.msra.mxu0 0.0
        %825 = vmatprep.subr.mxu0 0.0
        %826 = vmatpush2.msra.mxu0 0.0
        %827 = vmatprep.subr.mxu0 0.0
        %828 = vmatpush2.msra.mxu0 0.0
        %829 = vmatprep.subr.mxu0 0.0
        %830 = vmatpush2.msra.mxu0 0.0
        %831 = vmatprep.subr.mxu0 0.0
        %832 = vmatpush2.msra.mxu0 0.0
        %833 = vmatprep.subr.mxu0 0.0
        %834 = vmatpush2.msra.mxu0 0.0
        %835 = vmatprep.subr.mxu0 0.0
        %836 = vmatpush2.msra.mxu0 0.0
        %837 = vmatprep.subr.mxu0 0.0
        %838 = vmatpush2.msra.mxu0 0.0
        %839 = vmatprep.subr.mxu0 0.0
        %840 = vmatpush2.msra.mxu0 0.0
        %841 = vmatprep.subr.mxu0 0.0
        %842 = vmatpush2.msra.mxu0 0.0
        %843 = vmatprep.subr.mxu0 0.0
        %844 = vmatpush2.msra.mxu0 0.0
        %845 = vmatprep.subr.mxu0 0.0
        %846 = vmatpush2.msra.mxu0 0.0
        %847 = vmatprep.mubr.f32.mxu0 0.0
        %848 = vmatmul.mubr.f32.gmra.mxu0 %v772
        %v849 = vpop.f32.mrf.mxu0
        %v850 = vadd.f32 %v754, %v849
        %v851 = vpop.f32.mrf.mxu0
        %v852 = vadd.f32 %v754, %v851
        %853 = vmatprep.mubr.f32.mxu0 0.0
        %854 = vmatmul.mubr.f32.gmra.mxu0 %v775
        %v855 = vpop.f32.mrf.mxu0
        %v856 = vadd.f32 %v759, %v855
        %v857 = vpop.f32.mrf.mxu0
        %v858 = vadd.f32 %v759, %v857
        %859 = vmatprep.mubr.f32.mxu0 0.0
        %860 = vmatmul.mubr.f32.gmra.mxu0 %v778
        %v861 = vpop.f32.mrf.mxu0
        %v862 = vadd.f32 %v764, %v861
        %v863 = vpop.f32.mrf.mxu0
        %v864 = vadd.f32 %v764, %v863
        %865 = vmatprep.mubr.f32.mxu0 0.0
        %866 = vmatmul.mubr.f32.gmra.mxu0 %v781
        %v867 = vpop.f32.mrf.mxu0
        %v868 = vadd.f32 %v769, %v867
        %v869 = vpop.f32.mrf.mxu0
        %v870 = vadd.f32 %v769, %v869
        %871 = vdwg.mxu0
        %872 = vst [vmem:[%s491] sm:$0xff] %v850
        %873 = vst [vmem:[%s491 + $0x8] sm:$0xff] %v852
        %874 = vst [vmem:[%s491 + $0x10] sm:$0xff] %v856
        %875 = vst [vmem:[%s491 + $0x18] sm:$0xff] %v858
        %876 = vst [vmem:[%s491 + $0x20] sm:$0xff] %v862
        %877 = vst [vmem:[%s491 + $0x28] sm:$0xff] %v864
        %878 = vst [vmem:[%s491 + $0x30] sm:$0xff] %v868
        %879 = vst [vmem:[%s491 + $0x38] sm:$0xff] %v870
        %v880 = vmul.f32 %v631, 400.0
        %v881 = vmul.f32 %v633, 400.0
        %v882 = vand.u32 2147483647, %v880
        %v883 = vand.u32 2147483647, %v881
        %v884 = vsub.f32 0.0, %v882
        %v885 = vsub.f32 0.0, %v883
        %v886 = vmul.f32 %v884, 1.442695
        %v887 = vpow.pop %v886
        %v888 = vmul.f32 %v885, 1.442695
        %v889 = vpow.pop %v888
        %v890 = vadd.f32 %v887, 1.0
        %v891 = vadd.f32 %v889, 1.0
        %v892 = vlog2.pop %v890
        %v893 = vmul.f32 %v892, 0.6931472
        %v894 = vlog2.pop %v891
        %v895 = vmul.f32 %v894, 0.6931472
        %v896 = vrcp.pop %v890
        %v897 = vmul.f32 %v887, %v896
        %v898 = vrcp.pop %v891
        %v899 = vmul.f32 %v889, %v898
        %v900 = vmul.f32 %v882, %v897
        %v901 = vmul.f32 %v883, %v899
        %v902 = vadd.f32 %v893, %v900
        %v903 = vadd.f32 %v895, %v901
        %v904 = vmin.f32 %v880, 0.0
        %v905 = vmin.f32 %v881, 0.0
        %v906 = vsub.f32 %v904, %v893
        %v907 = vsub.f32 %v905, %v895
        %v908 = vmax.f32 %v880, 0.0
        %v909 = vmax.f32 %v881, 0.0
        %v910 = vsub.f32 0.0, %v908
        %v911 = vsub.f32 0.0, %v909
        %v912 = vsub.f32 %v910, %v893
        %v913 = vsub.f32 %v911, %v895
        %v914 = vsub.f32 %v631, %v643
        %v915 = vsub.f32 %v633, %v644
        %v916 = vmul.f32 %v914, %v914
        %v917 = vmul.f32 %v915, %v915
        %v918 = vld [vmem:[#allocation2] sm:$0xff]
        %v919 = vld [vmem:[#allocation2 + $0x8] sm:$0xff]
        %v920 = vadd.f32 %v918, %v902
        %v921 = vadd.f32 %v919, %v903
        %922 = vst [vmem:[#allocation2] sm:$0xff] %v920
        %923 = vst [vmem:[#allocation2 + $0x8] sm:$0xff] %v921
        %v924 = vld [vmem:[#allocation3] sm:$0xff]
        %v925 = vld [vmem:[#allocation3 + $0x8] sm:$0xff]
        %v926 = vadd.f32 %v924, %v916
        %v927 = vadd.f32 %v925, %v917
        %928 = vst [vmem:[#allocation3] sm:$0xff] %v926
        %929 = vst [vmem:[#allocation3 + $0x8] sm:$0xff] %v927
        %v930 = vld [vmem:[%s6] sm:$0xff]
        %v931 = vld [vmem:[%s6 + $0x8] sm:$0xff]
        %v932 = vld [vmem:[%s7] sm:$0xff]
        %v933 = vld [vmem:[%s7 + $0x8] sm:$0xff]
        %v935 = vsel %vm646, %v932, 0
        %v938 = vsel %vm646, %v933, 0
        %940 = vmatprep.subr.mxu0 0.0
        %941 = vmatpush1.msra.mxu0 0.0
        %942 = vmatprep.subr.mxu0 0.0
        %943 = vmatpush1.msra.mxu0 0.0
        %944 = vmatprep.subr.mxu0 0.0
        %945 = vmatpush1.msra.mxu0 0.0
        %946 = vmatprep.subr.mxu0 0.0
        %947 = vmatpush1.msra.mxu0 0.0
        %948 = vmatprep.subr.mxu0 0.0
        %949 = vmatpush1.msra.mxu0 0.0
        %950 = vmatprep.subr.mxu0 0.0
        %951 = vmatpush1.msra.mxu0 0.0
        %952 = vmatprep.subr.mxu0 0.0
        %953 = vmatpush1.msra.mxu0 0.0
        %954 = vmatprep.subr.mxu0 0.0
        %955 = vmatpush1.msra.mxu0 0.0
        %956 = vmatprep.subr.mxu0 0.0
        %957 = vmatpush1.msra.mxu0 0.0
        %958 = vmatprep.subr.mxu0 0.0
        %959 = vmatpush1.msra.mxu0 0.0
        %960 = vmatprep.subr.mxu0 0.0
        %961 = vmatpush1.msra.mxu0 0.0
        %962 = vmatprep.subr.mxu0 0.0
        %963 = vmatpush1.msra.mxu0 0.0
        %964 = vmatprep.subr.mxu0 0.0
        %965 = vmatpush1.msra.mxu0 0.0
        %966 = vmatprep.subr.mxu0 0.0
        %967 = vmatpush1.msra.mxu0 0.0
        %968 = vmatprep.subr.mxu0 0.0
        %969 = vmatpush1.msra.mxu0 0.0
        %970 = vmatprep.subr.mxu0 %v913
        %971 = vmatpush1.msra.mxu0 %v912
        %972 = vmatprep.subr.mxu0 0.0
        %973 = vmatpush2.msra.mxu0 0.0
        %974 = vmatprep.subr.mxu0 0.0
        %975 = vmatpush2.msra.mxu0 0.0
        %976 = vmatprep.subr.mxu0 0.0
        %977 = vmatpush2.msra.mxu0 0.0
        %978 = vmatprep.subr.mxu0 0.0
        %979 = vmatpush2.msra.mxu0 0.0
        %980 = vmatprep.subr.mxu0 0.0
        %981 = vmatpush2.msra.mxu0 0.0
        %982 = vmatprep.subr.mxu0 0.0
        %983 = vmatpush2.msra.mxu0 0.0
        %984 = vmatprep.subr.mxu0 0.0
        %985 = vmatpush2.msra.mxu0 0.0
        %986 = vmatprep.subr.mxu0 0.0
        %987 = vmatpush2.msra.mxu0 0.0
        %988 = vmatprep.subr.mxu0 0.0
        %989 = vmatpush2.msra.mxu0 0.0
        %990 = vmatprep.subr.mxu0 0.0
        %991 = vmatpush2.msra.mxu0 0.0
        %992 = vmatprep.subr.mxu0 0.0
        %993 = vmatpush2.msra.mxu0 0.0
        %994 = vmatprep.subr.mxu0 0.0
        %995 = vmatpush2.msra.mxu0 0.0
        %996 = vmatprep.subr.mxu0 0.0
        %997 = vmatpush2.msra.mxu0 0.0
        %998 = vmatprep.subr.mxu0 0.0
        %999 = vmatpush2.msra.mxu0 0.0
        %1000 = vmatprep.subr.mxu0 0.0
        %1001 = vmatpush2.msra.mxu0 0.0
        %1002 = vmatprep.subr.mxu0 0.0
        %1003 = vmatpush2.msra.mxu0 0.0
        %1004 = vmatprep.mubr.f32.mxu0 0.0
        %1005 = vmatmul.mubr.f32.gmra.mxu0 %v935
        %v1006 = vpop.f32.mrf.mxu0
        %v1007 = vadd.f32 0.0, %v1006
        %v1008 = vpop.f32.mrf.mxu0
        %v1009 = vadd.f32 0.0, %v1008
        %1010 = vmatprep.mubr.f32.mxu0 0.0
        %1011 = vmatmul.mubr.f32.gmra.mxu0 %v938
        %v1012 = vpop.f32.mrf.mxu0
        %v1013 = vadd.f32 0.0, %v1012
        %v1014 = vpop.f32.mrf.mxu0
        %v1015 = vadd.f32 0.0, %v1014
        %1016 = vdwg.mxu0
        %v1018 = vsel %vm646, %v930, 0
        %v1021 = vsel %vm646, %v931, 0
        %1023 = vmatprep.subr.mxu0 0.0
        %1024 = vmatpush1.msra.mxu0 0.0
        %1025 = vmatprep.subr.mxu0 0.0
        %1026 = vmatpush1.msra.mxu0 0.0
        %1027 = vmatprep.subr.mxu0 0.0
        %1028 = vmatpush1.msra.mxu0 0.0
        %1029 = vmatprep.subr.mxu0 0.0
        %1030 = vmatpush1.msra.mxu0 0.0
        %1031 = vmatprep.subr.mxu0 0.0
        %1032 = vmatpush1.msra.mxu0 0.0
        %1033 = vmatprep.subr.mxu0 0.0
        %1034 = vmatpush1.msra.mxu0 0.0
        %1035 = vmatprep.subr.mxu0 0.0
        %1036 = vmatpush1.msra.mxu0 0.0
        %1037 = vmatprep.subr.mxu0 0.0
        %1038 = vmatpush1.msra.mxu0 0.0
        %1039 = vmatprep.subr.mxu0 0.0
        %1040 = vmatpush1.msra.mxu0 0.0
        %1041 = vmatprep.subr.mxu0 0.0
        %1042 = vmatpush1.msra.mxu0 0.0
        %1043 = vmatprep.subr.mxu0 0.0
        %1044 = vmatpush1.msra.mxu0 0.0
        %1045 = vmatprep.subr.mxu0 0.0
        %1046 = vmatpush1.msra.mxu0 0.0
        %1047 = vmatprep.subr.mxu0 0.0
        %1048 = vmatpush1.msra.mxu0 0.0
        %1049 = vmatprep.subr.mxu0 0.0
        %1050 = vmatpush1.msra.mxu0 0.0
        %1051 = vmatprep.subr.mxu0 0.0
        %1052 = vmatpush1.msra.mxu0 0.0
        %1053 = vmatprep.subr.mxu0 %v907
        %1054 = vmatpush1.msra.mxu0 %v906
        %1055 = vmatprep.subr.mxu0 0.0
        %1056 = vmatpush2.msra.mxu0 0.0
        %1057 = vmatprep.subr.mxu0 0.0
        %1058 = vmatpush2.msra.mxu0 0.0
        %1059 = vmatprep.subr.mxu0 0.0
        %1060 = vmatpush2.msra.mxu0 0.0
        %1061 = vmatprep.subr.mxu0 0.0
        %1062 = vmatpush2.msra.mxu0 0.0
        %1063 = vmatprep.subr.mxu0 0.0
        %1064 = vmatpush2.msra.mxu0 0.0
        %1065 = vmatprep.subr.mxu0 0.0
        %1066 = vmatpush2.msra.mxu0 0.0
        %1067 = vmatprep.subr.mxu0 0.0
        %1068 = vmatpush2.msra.mxu0 0.0
        %1069 = vmatprep.subr.mxu0 0.0
        %1070 = vmatpush2.msra.mxu0 0.0
        %1071 = vmatprep.subr.mxu0 0.0
        %1072 = vmatpush2.msra.mxu0 0.0
        %1073 = vmatprep.subr.mxu0 0.0
        %1074 = vmatpush2.msra.mxu0 0.0
        %1075 = vmatprep.subr.mxu0 0.0
        %1076 = vmatpush2.msra.mxu0 0.0
        %1077 = vmatprep.subr.mxu0 0.0
        %1078 = vmatpush2.msra.mxu0 0.0
        %1079 = vmatprep.subr.mxu0 0.0
        %1080 = vmatpush2.msra.mxu0 0.0
        %1081 = vmatprep.subr.mxu0 0.0
        %1082 = vmatpush2.msra.mxu0 0.0
        %1083 = vmatprep.subr.mxu0 0.0
        %1084 = vmatpush2.msra.mxu0 0.0
        %1085 = vmatprep.subr.mxu0 0.0
        %1086 = vmatpush2.msra.mxu0 0.0
        %1087 = vmatprep.mubr.f32.mxu0 0.0
        %1088 = vmatmul.mubr.f32.gmra.mxu0 %v1018
        %v1089 = vpop.f32.mrf.mxu0
        %v1090 = vadd.f32 %v1007, %v1089
        %v1091 = vpop.f32.mrf.mxu0
        %v1092 = vadd.f32 %v1009, %v1091
        %1093 = vmatprep.mubr.f32.mxu0 0.0
        %1094 = vmatmul.mubr.f32.gmra.mxu0 %v1021
        %v1095 = vpop.f32.mrf.mxu0
        %v1096 = vadd.f32 %v1013, %v1095
        %v1097 = vpop.f32.mrf.mxu0
        %v1098 = vadd.f32 %v1015, %v1097
        %1099 = vdwg.mxu0
        %v1100 = vld [vmem:[%s8] sm:$0xff]
        %v1101 = vld [vmem:[%s8 + $0x8] sm:$0xff]
        %v1102 = vld [vmem:[%s9] sm:$0xff]
        %v1103 = vld [vmem:[%s9 + $0x8] sm:$0xff]
        %v1105 = vsel %vm646, %v1102, 0
        %v1108 = vsel %vm646, %v1103, 0
        %1110 = vmatprep.subr.mxu0 0.0
        %1111 = vmatpush1.msra.mxu0 0.0
        %1112 = vmatprep.subr.mxu0 0.0
        %1113 = vmatpush1.msra.mxu0 0.0
        %1114 = vmatprep.subr.mxu0 0.0
        %1115 = vmatpush1.msra.mxu0 0.0
        %1116 = vmatprep.subr.mxu0 0.0
        %1117 = vmatpush1.msra.mxu0 0.0
        %1118 = vmatprep.subr.mxu0 0.0
        %1119 = vmatpush1.msra.mxu0 0.0
        %1120 = vmatprep.subr.mxu0 0.0
        %1121 = vmatpush1.msra.mxu0 0.0
        %1122 = vmatprep.subr.mxu0 0.0
        %1123 = vmatpush1.msra.mxu0 0.0
        %1124 = vmatprep.subr.mxu0 0.0
        %1125 = vmatpush1.msra.mxu0 0.0
        %1126 = vmatprep.subr.mxu0 0.0
        %1127 = vmatpush1.msra.mxu0 0.0
        %1128 = vmatprep.subr.mxu0 0.0
        %1129 = vmatpush1.msra.mxu0 0.0
        %1130 = vmatprep.subr.mxu0 0.0
        %1131 = vmatpush1.msra.mxu0 0.0
        %1132 = vmatprep.subr.mxu0 0.0
        %1133 = vmatpush1.msra.mxu0 0.0
        %1134 = vmatprep.subr.mxu0 0.0
        %1135 = vmatpush1.msra.mxu0 0.0
        %1136 = vmatprep.subr.mxu0 0.0
        %1137 = vmatpush1.msra.mxu0 0.0
        %1138 = vmatprep.subr.mxu0 0.0
        %1139 = vmatpush1.msra.mxu0 0.0
        %1140 = vmatprep.subr.mxu0 %v913
        %1141 = vmatpush1.msra.mxu0 %v912
        %1142 = vmatprep.subr.mxu0 0.0
        %1143 = vmatpush2.msra.mxu0 0.0
        %1144 = vmatprep.subr.mxu0 0.0
        %1145 = vmatpush2.msra.mxu0 0.0
        %1146 = vmatprep.subr.mxu0 0.0
        %1147 = vmatpush2.msra.mxu0 0.0
        %1148 = vmatprep.subr.mxu0 0.0
        %1149 = vmatpush2.msra.mxu0 0.0
        %1150 = vmatprep.subr.mxu0 0.0
        %1151 = vmatpush2.msra.mxu0 0.0
        %1152 = vmatprep.subr.mxu0 0.0
        %1153 = vmatpush2.msra.mxu0 0.0
        %1154 = vmatprep.subr.mxu0 0.0
        %1155 = vmatpush2.msra.mxu0 0.0
        %1156 = vmatprep.subr.mxu0 0.0
        %1157 = vmatpush2.msra.mxu0 0.0
        %1158 = vmatprep.subr.mxu0 0.0
        %1159 = vmatpush2.msra.mxu0 0.0
        %1160 = vmatprep.subr.mxu0 0.0
        %1161 = vmatpush2.msra.mxu0 0.0
        %1162 = vmatprep.subr.mxu0 0.0
        %1163 = vmatpush2.msra.mxu0 0.0
        %1164 = vmatprep.subr.mxu0 0.0
        %1165 = vmatpush2.msra.mxu0 0.0
        %1166 = vmatprep.subr.mxu0 0.0
        %1167 = vmatpush2.msra.mxu0 0.0
        %1168 = vmatprep.subr.mxu0 0.0
        %1169 = vmatpush2.msra.mxu0 0.0
        %1170 = vmatprep.subr.mxu0 0.0
        %1171 = vmatpush2.msra.mxu0 0.0
        %1172 = vmatprep.subr.mxu0 0.0
        %1173 = vmatpush2.msra.mxu0 0.0
        %1174 = vmatprep.mubr.f32.mxu0 0.0
        %1175 = vmatmul.mubr.f32.gmra.mxu0 %v1105
        %v1176 = vpop.f32.mrf.mxu0
        %v1177 = vadd.f32 0.0, %v1176
        %v1178 = vpop.f32.mrf.mxu0
        %v1179 = vadd.f32 0.0, %v1178
        %1180 = vmatprep.mubr.f32.mxu0 0.0
        %1181 = vmatmul.mubr.f32.gmra.mxu0 %v1108
        %v1182 = vpop.f32.mrf.mxu0
        %v1183 = vadd.f32 0.0, %v1182
        %v1184 = vpop.f32.mrf.mxu0
        %v1185 = vadd.f32 0.0, %v1184
        %1186 = vdwg.mxu0
        %v1188 = vsel %vm646, %v1100, 0
        %v1191 = vsel %vm646, %v1101, 0
        %1193 = vmatprep.subr.mxu0 0.0
        %1194 = vmatpush1.msra.mxu0 0.0
        %1195 = vmatprep.subr.mxu0 0.0
        %1196 = vmatpush1.msra.mxu0 0.0
        %1197 = vmatprep.subr.mxu0 0.0
        %1198 = vmatpush1.msra.mxu0 0.0
        %1199 = vmatprep.subr.mxu0 0.0
        %1200 = vmatpush1.msra.mxu0 0.0
        %1201 = vmatprep.subr.mxu0 0.0
        %1202 = vmatpush1.msra.mxu0 0.0
        %1203 = vmatprep.subr.mxu0 0.0
        %1204 = vmatpush1.msra.mxu0 0.0
        %1205 = vmatprep.subr.mxu0 0.0
        %1206 = vmatpush1.msra.mxu0 0.0
        %1207 = vmatprep.subr.mxu0 0.0
        %1208 = vmatpush1.msra.mxu0 0.0
        %1209 = vmatprep.subr.mxu0 0.0
        %1210 = vmatpush1.msra.mxu0 0.0
        %1211 = vmatprep.subr.mxu0 0.0
        %1212 = vmatpush1.msra.mxu0 0.0
        %1213 = vmatprep.subr.mxu0 0.0
        %1214 = vmatpush1.msra.mxu0 0.0
        %1215 = vmatprep.subr.mxu0 0.0
        %1216 = vmatpush1.msra.mxu0 0.0
        %1217 = vmatprep.subr.mxu0 0.0
        %1218 = vmatpush1.msra.mxu0 0.0
        %1219 = vmatprep.subr.mxu0 0.0
        %1220 = vmatpush1.msra.mxu0 0.0
        %1221 = vmatprep.subr.mxu0 0.0
        %1222 = vmatpush1.msra.mxu0 0.0
        %1223 = vmatprep.subr.mxu0 %v907
        %1224 = vmatpush1.msra.mxu0 %v906
        %1225 = vmatprep.subr.mxu0 0.0
        %1226 = vmatpush2.msra.mxu0 0.0
        %1227 = vmatprep.subr.mxu0 0.0
        %1228 = vmatpush2.msra.mxu0 0.0
        %1229 = vmatprep.subr.mxu0 0.0
        %1230 = vmatpush2.msra.mxu0 0.0
        %1231 = vmatprep.subr.mxu0 0.0
        %1232 = vmatpush2.msra.mxu0 0.0
        %1233 = vmatprep.subr.mxu0 0.0
        %1234 = vmatpush2.msra.mxu0 0.0
        %1235 = vmatprep.subr.mxu0 0.0
        %1236 = vmatpush2.msra.mxu0 0.0
        %1237 = vmatprep.subr.mxu0 0.0
        %1238 = vmatpush2.msra.mxu0 0.0
        %1239 = vmatprep.subr.mxu0 0.0
        %1240 = vmatpush2.msra.mxu0 0.0
        %1241 = vmatprep.subr.mxu0 0.0
        %1242 = vmatpush2.msra.mxu0 0.0
        %1243 = vmatprep.subr.mxu0 0.0
        %1244 = vmatpush2.msra.mxu0 0.0
        %1245 = vmatprep.subr.mxu0 0.0
        %1246 = vmatpush2.msra.mxu0 0.0
        %1247 = vmatprep.subr.mxu0 0.0
        %1248 = vmatpush2.msra.mxu0 0.0
        %1249 = vmatprep.subr.mxu0 0.0
        %1250 = vmatpush2.msra.mxu0 0.0
        %1251 = vmatprep.subr.mxu0 0.0
        %1252 = vmatpush2.msra.mxu0 0.0
        %1253 = vmatprep.subr.mxu0 0.0
        %1254 = vmatpush2.msra.mxu0 0.0
        %1255 = vmatprep.subr.mxu0 0.0
        %1256 = vmatpush2.msra.mxu0 0.0
        %1257 = vmatprep.mubr.f32.mxu0 0.0
        %1258 = vmatmul.mubr.f32.gmra.mxu0 %v1188
        %v1259 = vpop.f32.mrf.mxu0
        %v1260 = vadd.f32 %v1177, %v1259
        %v1261 = vpop.f32.mrf.mxu0
        %v1262 = vadd.f32 %v1179, %v1261
        %1263 = vmatprep.mubr.f32.mxu0 0.0
        %1264 = vmatmul.mubr.f32.gmra.mxu0 %v1191
        %v1265 = vpop.f32.mrf.mxu0
        %v1266 = vadd.f32 %v1183, %v1265
        %v1267 = vpop.f32.mrf.mxu0
        %v1268 = vadd.f32 %v1185, %v1267
        %1269 = vdwg.mxu0
        %v1270 = vmul.f32 %v1090, 1.442695
        %v1271 = vpow.pop %v1270
        %v1272 = vmul.f32 %v1092, 1.442695
        %v1273 = vpow.pop %v1272
        %v1274 = vmul.f32 %v1096, 1.442695
        %v1275 = vpow.pop %v1274
        %v1276 = vmul.f32 %v1098, 1.442695
        %v1277 = vpow.pop %v1276
        %v1278 = vmul.f32 %v1260, 1.442695
        %v1279 = vpow.pop %v1278
        %v1280 = vmul.f32 %v1262, 1.442695
        %v1281 = vpow.pop %v1280
        %v1282 = vmul.f32 %v1266, 1.442695
        %v1283 = vpow.pop %v1282
        %v1284 = vmul.f32 %v1268, 1.442695
        %v1285 = vpow.pop %v1284
        %v1286 = vld [vmem:[#allocation4] sm:$0xff]
        %v1287 = vld [vmem:[#allocation4 + $0x8] sm:$0xff]
        %1288 = vmatprep.subr.mxu0 0.0
        %1289 = vmatpush1.xpose.msra.mxu0 0.0
        %1290 = vmatprep.subr.mxu0 0.0
        %1291 = vmatpush1.xpose.msra.mxu0 0.0
        %1292 = vmatprep.subr.mxu0 0.0
        %1293 = vmatpush1.xpose.msra.mxu0 0.0
        %1294 = vmatprep.subr.mxu0 0.0
        %1295 = vmatpush1.xpose.msra.mxu0 0.0
        %1296 = vmatprep.subr.mxu0 0.0
        %1297 = vmatpush1.xpose.msra.mxu0 0.0
        %1298 = vmatprep.subr.mxu0 0.0
        %1299 = vmatpush1.xpose.msra.mxu0 0.0
        %1300 = vmatprep.subr.mxu0 0.0
        %1301 = vmatpush1.xpose.msra.mxu0 0.0
        %1302 = vmatprep.subr.mxu0 0.0
        %1303 = vmatpush1.xpose.msra.mxu0 0.0
        %1304 = vmatprep.subr.mxu0 0.0
        %1305 = vmatpush1.xpose.msra.mxu0 0.0
        %1306 = vmatprep.subr.mxu0 0.0
        %1307 = vmatpush1.xpose.msra.mxu0 0.0
        %1308 = vmatprep.subr.mxu0 0.0
        %1309 = vmatpush1.xpose.msra.mxu0 0.0
        %1310 = vmatprep.subr.mxu0 0.0
        %1311 = vmatpush1.xpose.msra.mxu0 0.0
        %1312 = vmatprep.subr.mxu0 0.0
        %1313 = vmatpush1.xpose.msra.mxu0 0.0
        %1314 = vmatprep.subr.mxu0 0.0
        %1315 = vmatpush1.xpose.msra.mxu0 0.0
        %1316 = vmatprep.subr.mxu0 %v1285
        %1317 = vmatpush1.xpose.msra.mxu0 %v1283
        %1318 = vmatprep.subr.mxu0 %v1281
        %1319 = vmatpush1.xpose.msra.mxu0 %v1279
        %1320 = vmatprep.subr.mxu0 0.0
        %1321 = vmatpush2.xpose.msra.mxu0 0.0
        %1322 = vmatprep.subr.mxu0 0.0
        %1323 = vmatpush2.xpose.msra.mxu0 0.0
        %1324 = vmatprep.subr.mxu0 0.0
        %1325 = vmatpush2.xpose.msra.mxu0 0.0
        %1326 = vmatprep.subr.mxu0 0.0
        %1327 = vmatpush2.xpose.msra.mxu0 0.0
        %1328 = vmatprep.subr.mxu0 0.0
        %1329 = vmatpush2.xpose.msra.mxu0 0.0
        %1330 = vmatprep.subr.mxu0 0.0
        %1331 = vmatpush2.xpose.msra.mxu0 0.0
        %1332 = vmatprep.subr.mxu0 0.0
        %1333 = vmatpush2.xpose.msra.mxu0 0.0
        %1334 = vmatprep.subr.mxu0 0.0
        %1335 = vmatpush2.xpose.msra.mxu0 0.0
        %1336 = vmatprep.subr.mxu0 0.0
        %1337 = vmatpush2.xpose.msra.mxu0 0.0
        %1338 = vmatprep.subr.mxu0 0.0
        %1339 = vmatpush2.xpose.msra.mxu0 0.0
        %1340 = vmatprep.subr.mxu0 0.0
        %1341 = vmatpush2.xpose.msra.mxu0 0.0
        %1342 = vmatprep.subr.mxu0 0.0
        %1343 = vmatpush2.xpose.msra.mxu0 0.0
        %1344 = vmatprep.subr.mxu0 0.0
        %1345 = vmatpush2.xpose.msra.mxu0 0.0
        %1346 = vmatprep.subr.mxu0 0.0
        %1347 = vmatpush2.xpose.msra.mxu0 0.0
        %1348 = vmatprep.subr.mxu0 0.0
        %1349 = vmatpush2.xpose.msra.mxu0 0.0
        %1350 = vmatprep.subr.mxu0 0.0
        %1351 = vmatpush2.xpose.msra.mxu0 0.0
        %1352 = vmatprep.mubr.f32.mxu0 %v1273
        %1353 = vmatmul.mubr.f32.gmra.mxu0 %v1271
        %v1354 = vpop.f32.mrf.mxu0
        %v1355 = vadd.f32 0.0, %v1354
        %v1356 = vpop.f32.mrf.mxu0
        %1357 = vmatprep.mubr.f32.mxu0 %v1277
        %1358 = vmatmul.mubr.f32.gmra.mxu0 %v1275
        %v1359 = vpop.f32.mrf.mxu0
        %v1360 = vadd.f32 0.0, %v1359
        %v1361 = vpop.f32.mrf.mxu0
        %1362 = vdwg.mxu0
        %v1363 = vadd.f32 %v1286, %v1355
        %v1364 = vadd.f32 %v1287, %v1360
        %vm1365 = vcmask 130048
        %1366 = vst.msk [vmem:[#allocation4] sm:$0xff] %vm1365, %v1363
        %1367 = vst.msk [vmem:[#allocation4 + $0x8] sm:$0xff] %vm1365, %v1364
        // Predicated region
        $region65: #{tpu_custom_call.1} parent=59 // pred_check
          %p1368 = pneg %p534
        $region66: #{tpu_custom_call.1} parent=59 // pred_check_branch
          %1370 = sbr.rel (%p1368) target = $region68
        $region67: #{tpu_custom_call.1} parent=59 // pred_region
          %v1371 = vld [vmem:[#allocation2] sm:$0xff]
          %v1372 = vld [vmem:[#allocation2 + $0x8] sm:$0xff]
          %v1373 = vadd.f32 %v1371, %v1372
          %1374 = vadd.xlane.f32.xlu0 %v1373
          %v1375 = vpop.xlane.xlu0 %1374
          %v1376 = vrot.slane %v1375, 4
          %v1377 = vadd.f32 %v1375, %v1376
          %v1378 = vrot.slane %v1377, 2
          %v1379 = vadd.f32 %v1377, %v1378
          %v1380 = vrot.slane %v1379, 1
          %v1381 = vadd.f32 %v1379, %v1380
          %v1382 = vld [vmem:[#allocation3] sm:$0xff]
          %v1383 = vld [vmem:[#allocation3 + $0x8] sm:$0xff]
          %v1384 = vadd.f32 %v1382, %v1383
          %1385 = vadd.xlane.f32.xlu0 %v1384
          %v1386 = vpop.xlane.xlu0 %1385
          %v1387 = vrot.slane %v1386, 4
          %v1388 = vadd.f32 %v1386, %v1387
          %v1389 = vrot.slane %v1388, 2
          %v1390 = vadd.f32 %v1388, %v1389
          %v1391 = vrot.slane %v1390, 1
          %v1392 = vadd.f32 %v1390, %v1391
          %vm1393 = vcmask 0
          %1394 = vst.msk [vmem:[%s530] sm:$0x1] %vm1393, %v1381
          %1395 = vst.msk [vmem:[%s533] sm:$0x1] %vm1393, %v1392
          %v1396 = vld [vmem:[#allocation4] sm:$0xff]
          %v1397 = vld [vmem:[#allocation4 + $0x8] sm:$0xff]
          %1398 = vst.msk [vmem:[%s515] sm:$0xff] %vm1365, %v1396
          %1399 = vst.msk [vmem:[%s515 + $0x8] sm:$0xff] %vm1365, %v1397
        $region68: #{tpu_custom_call.1} parent=59 // pred_fallthru
          _
        %s1400 = sand.u32 %s271, 1
        %s1401 = scalar_lea.sflag [#allocation6], %s1400
        %s1402 = sand.u32 %s271, 1
        %s1403 = smul.addr %s1402, 64
        %s1404 = scalar_lea.vmem [#allocation5], %s1403
        %s1405 = sand.u32 %s32, 1
        %s1406 = scalar_lea.sflag [#allocation8], %s1405
        %s1407 = sand.u32 %s299, 1
        %s1408 = smul.addr %s1407, 2
        %s1409 = scalar_lea.vmem [#allocation7], %s1408
        %p1410 = scmp.lt.s32.totalorder %s36, 1
        %s1411 = scalar_select %p1410, %s36, 1
        %s1412 = scalar_lea.vmem %s12, %s1411
        %p1413 = scmp.lt.s32.totalorder %s36, 1
        %s1414 = scalar_select %p1413, %s36, 1
        %s1415 = scalar_lea.vmem %s13, %s1414
        %s1416 = sand.u32 %s32, 1
        %s1417 = scalar_lea.sflag [#allocation8], %s1416
        %s1418 = sand.u32 %s377, 1
        %s1419 = smul.addr %s1418, 16
        %s1420 = scalar_lea.vmem [#allocation9], %s1419
        // Predicated region
        $region69: #{tpu_custom_call.1} parent=59 // pred_check
          %p1421 = pneg %p281
        $region70: #{tpu_custom_call.1} parent=59 // pred_check_branch
          %1423 = sbr.rel (%p1421) target = $region72
        $region71: #{tpu_custom_call.1} parent=59 // pred_region
          %s1424 = smul.u32 2, %s37
          %s1426 = ssub.s32 1024, 1024
          %1427 = vsyncadd %s1401, %s1426
          %s1428 = smul.addr %s36, 8
          %s1429 = sadd.s32 %s1424, %s1428
          %s1430 = smul.addr %s1429, 128
          %s1431 = scalar_lea.hbm %s10, %s1430
          %s1432 = sshll.u32 %s1404, 4
          %s1433 = int_to_ptr.vmem [resolvable:$true] %s1432
          %1438 = dma.vmem_to_hbm [thread:$0]  %s1433, 1024, %s1431, %s1401, 256, 256, 16
        $region72: #{tpu_custom_call.1} parent=59 // pred_fallthru
          _
        // Predicated region
        $region73: #{tpu_custom_call.1} parent=59 // pred_check
          %p1439 = pneg %p309
        $region74: #{tpu_custom_call.1} parent=59 // pred_check_branch
          %1441 = sbr.rel (%p1439) target = $region76
        $region75: #{tpu_custom_call.1} parent=59 // pred_region
          %s1442 = smul.u32 2, %s37
          %s1444 = ssub.s32 32, 32
          %1445 = vsyncadd %s1406, %s1444
          %s1446 = smul.addr %s36, 2
          %s1447 = sadd.s32 %s1442, %s1446
          %s1448 = smul.addr %s1447, 16
          %s1449 = scalar_lea.hbm %s11, %s1448
          %s1451 = sshll.u32 %s1409, 4
          %s1452 = int_to_ptr.vmem [resolvable:$true] %s1451
          %1454 = dma.vmem_to_hbm [thread:$0]  %s1452, 32, %s1449, %s1406
        $region76: #{tpu_custom_call.1} parent=59 // pred_fallthru
          _
        // Predicated region
        $region77: #{tpu_custom_call.1} parent=59 // pred_check
          %p1455 = pneg %p335
        $region78: #{tpu_custom_call.1} parent=59 // pred_check_branch
          %1457 = sbr.rel (%p1455) target = $region80
        $region79: #{tpu_custom_call.1} parent=59 // pred_region
          _
        $region80: #{tpu_custom_call.1} parent=59 // pred_fallthru
          _
        // Predicated region
        $region81: #{tpu_custom_call.1} parent=59 // pred_check
          %p1458 = pneg %p361
        $region82: #{tpu_custom_call.1} parent=59 // pred_check_branch
          %1460 = sbr.rel (%p1458) target = $region84
        $region83: #{tpu_custom_call.1} parent=59 // pred_region
          _
        $region84: #{tpu_custom_call.1} parent=59 // pred_fallthru
          _
        // Predicated region
        $region85: #{tpu_custom_call.1} parent=59 // pred_check
          %p1461 = pneg %p387
        $region86: #{tpu_custom_call.1} parent=59 // pred_check_branch
          %1463 = sbr.rel (%p1461) target = $region88
        $region87: #{tpu_custom_call.1} parent=59 // pred_region
          %s1465 = ssub.s32 256, 256
          %1466 = vsyncadd %s1417, %s1465
          %s1467 = smul.addr %s36, 2
          %s1468 = smul.addr %s1467, 128
          %s1469 = scalar_lea.hbm %s14, %s1468
          %s1470 = sshll.u32 %s1420, 4
          %s1471 = int_to_ptr.vmem [resolvable:$true] %s1470
          %1476 = dma.vmem_to_hbm [thread:$0]  %s1471, 256, %s1469, %s1417, 128, 128, 8
        $region88: #{tpu_custom_call.1} parent=59 // pred_fallthru
          _
      $region60: #{tpu_custom_call.1} parent=5 // pred_fallthru
        _
      %p1477 = scmp.le.s32.totalorder 2, %s27
      // Predicated region
      $region89: #{tpu_custom_call.1} parent=5 // pred_check
        %p1478 = pneg %p1477
      $region90: #{tpu_custom_call.1} parent=5 // pred_check_branch
        %1480 = sbr.rel (%p1478) target = $region92
      $region91: #{tpu_custom_call.1} parent=5 // pred_region
        %s1481 = ssub.s32 %s27, 2
        // Predicated region
        $region93: #{tpu_custom_call.1} parent=91 // pred_check
          %p1482 = pneg %p287
        $region94: #{tpu_custom_call.1} parent=91 // pred_check_branch
          %1484 = sbr.rel (%p1482) target = $region96
        $region95: #{tpu_custom_call.1} parent=91 // pred_region
          %s1485 = sand.u32 %s272, 1
          %s1486 = scalar_lea.sflag [#allocation6], %s1485
          %s1487 = sand.u32 %s272, 1
          %s1488 = smul.addr %s1487, 64
          %s1489 = scalar_lea.vmem [#allocation5], %s1488
          %1490 = dma.done %s1486, 1024
        $region96: #{tpu_custom_call.1} parent=91 // pred_fallthru
          _
        // Predicated region
        $region97: #{tpu_custom_call.1} parent=91 // pred_check
          %p1491 = pneg %p315
        $region98: #{tpu_custom_call.1} parent=91 // pred_check_branch
          %1493 = sbr.rel (%p1491) target = $region100
        $region99: #{tpu_custom_call.1} parent=91 // pred_region
          %s1494 = sand.u32 %s33, 1
          %s1495 = scalar_lea.sflag [#allocation8], %s1494
          %s1496 = sand.u32 %s300, 1
          %s1497 = smul.addr %s1496, 2
          %s1498 = scalar_lea.vmem [#allocation7], %s1497
          %1499 = dma.done %s1495, 32
        $region100: #{tpu_custom_call.1} parent=91 // pred_fallthru
          _
        // Predicated region
        $region101: #{tpu_custom_call.1} parent=91 // pred_check
          %p1500 = pneg %p341
        $region102: #{tpu_custom_call.1} parent=91 // pred_check_branch
          %1502 = sbr.rel (%p1500) target = $region104
        $region103: #{tpu_custom_call.1} parent=91 // pred_region
          %p1503 = scmp.lt.s32.totalorder %s38, 1
          %s1504 = scalar_select %p1503, %s38, 1
          %s1505 = scalar_lea.vmem %s12, %s1504
        $region104: #{tpu_custom_call.1} parent=91 // pred_fallthru
          _
        // Predicated region
        $region105: #{tpu_custom_call.1} parent=91 // pred_check
          %p1506 = pneg %p367
        $region106: #{tpu_custom_call.1} parent=91 // pred_check_branch
          %1508 = sbr.rel (%p1506) target = $region108
        $region107: #{tpu_custom_call.1} parent=91 // pred_region
          %p1509 = scmp.lt.s32.totalorder %s38, 1
          %s1510 = scalar_select %p1509, %s38, 1
          %s1511 = scalar_lea.vmem %s13, %s1510
        $region108: #{tpu_custom_call.1} parent=91 // pred_fallthru
          _
        // Predicated region
        $region109: #{tpu_custom_call.1} parent=91 // pred_check
          %p1512 = pneg %p393
        $region110: #{tpu_custom_call.1} parent=91 // pred_check_branch
          %1514 = sbr.rel (%p1512) target = $region112
        $region111: #{tpu_custom_call.1} parent=91 // pred_region
          %s1515 = sand.u32 %s33, 1
          %s1516 = scalar_lea.sflag [#allocation8], %s1515
          %s1517 = sand.u32 %s378, 1
          %s1518 = smul.addr %s1517, 16
          %s1519 = scalar_lea.vmem [#allocation9], %s1518
          %1520 = dma.done %s1516, 256
        $region112: #{tpu_custom_call.1} parent=91 // pred_fallthru
          _
      $region92: #{tpu_custom_call.1} parent=5 // pred_fallthru
        _
    $region6: #{tpu_custom_call.1} parent=1 // loop_footer
      %s31 = sadd.s32 1, %s27
    $region7: #{tpu_custom_call.1} parent=1 // loop_footer_branch
      %26 = sbr.rel target = $region3
    $region8: #{tpu_custom_call.1} parent=1 // loop_exit
      _
    %1521 = vsyncpa [#allocation6], 1
    %s1522 = scalar_lea.sflag [#allocation6], 1
    %1523 = vsyncpa %s1522, 1
    %1524 = vsyncpa [#allocation8], 1
    %s1525 = scalar_lea.sflag [#allocation8], 1
    %1526 = vsyncpa %s1525, 1

</llo_original>
